<compile_context>
chip_gen: v7x
topology: tpu7x:2x2x1
jax: 0.10.0
libtpu: 0.0.40
codegen_flags: <defaults>
</compile_context>

<pallas_src>
import functools

import jax
import jax.numpy as jnp
from jax import lax
from jax.experimental import pallas as pl
from jax.experimental.pallas import tpu as pltpu

EPS = 1e-5                     # nn.BatchNorm2d default eps
MATMUL_DTYPE = jnp.bfloat16    # MXU operand / scratch dtype (f32 accumulation)


# ------------------------------ Pallas kernel ------------------------------ #

def _basic_block_kernel(x_ref, b1_ref, s1_ref, c1_ref, b2_ref, s2_ref, c2_ref,
                        *rest, stride, has_sc, batch_block):
    # x_ref : (1, H*B, W*Cin)   bf16  batch-interleaved, lane-dense input slab
    # b1_ref: (3, W*Cin, X2)    bf16  block-Toeplitz weights, conv1 (kh taps)
    # b2_ref: (3, X2, X2)       bf16  block-Toeplitz weights, conv2
    # s*/c* : (1, X2)           f32   folded BN scale / bias, tiled over lanes
    # bsc   : (W*Cin, X2)       bf16  Toeplitz weights of the 1x1 shortcut conv
    # o_ref : (1, Ho*B, X2)           block output (slab layout)
    # scratch (bf16): stride 1 -> [xpad ((H+2)*B, X1), o1pad ((Ho+2)*B, X2)]
    #                 stride 2 -> [xpe ((Ho+1)*B, X1), xpo (Ho*B, X1), o1pad]
    if has_sc:
        bsc_ref, ssc_ref, csc_ref, o_ref = rest[:4]
        scratch = rest[4:]
    else:
        o_ref = rest[0]
        scratch = rest[1:]
    o1pad = scratch[-1]

    B = batch_block
    X1 = b1_ref.shape[1]
    X2 = o_ref.shape[2]
    M = o_ref.shape[1]                      # B * Ho  (matmul M dimension)
    Ho = M // B
    H = x_ref.shape[1] // B
    mm = b1_ref.dtype                       # bf16

    zeros_in = jnp.zeros((B, X1), mm)
    zeros_mid = jnp.zeros((B, X2), mm)

    # ---- stage the input slab into zero-haloed bf16 VMEM scratch ------------
    if stride == 1:
        xpad, = scratch[:-1]                # padded row r of image b at r*B + b
        xpad[0:B, :] = zeros_in
        xpad[(H + 1) * B:(H + 2) * B, :] = zeros_in
        xpad[B:(H + 1) * B, :] = x_ref[0]

        def tap1(kh):                       # rows (kh + ho) of the padded image
            return xpad[kh * B:kh * B + M, :]

        def shortcut_rows():                # rows (1 + ho)  == image rows ho
            return xpad[B:B + M, :]
    else:                                   # stride == 2
        # Even/odd padded rows staged into separate scratches -> every tap read
        # is a contiguous slab (no strided sublane reads, v5e-friendly).
        xpe, xpo = scratch[:-1]
        xpe[0:B, :] = zeros_in              # padded row 0 (top halo)
        for i in range(Ho):
            # padded row 2i+1 = image row 2i ; padded row 2i+2 = image row 2i+1
            xpo[i * B:(i + 1) * B, :] = x_ref[0, 2 * i * B:(2 * i + 1) * B, :]
            xpe[(i + 1) * B:(i + 2) * B, :] = \
                x_ref[0, (2 * i + 1) * B:(2 * i + 2) * B, :]

        def tap1(kh):                       # rows (kh + 2*ho) of the padded image
            if kh == 0:
                return xpe[0:M, :]
            if kh == 1:
                return xpo[0:M, :]
            return xpe[B:B + M, :]

        def shortcut_rows():                # rows (1 + 2*ho) == image rows 2*ho
            return xpo[0:M, :]

    # ---- conv1 (3x3, stride) + BN1 + ReLU  (three back-to-back MXU dots) ----
    acc1 = jnp.dot(tap1(0), b1_ref[0], preferred_element_type=jnp.float32)
    acc1 += jnp.dot(tap1(1), b1_ref[1], preferred_element_type=jnp.float32)
    acc1 += jnp.dot(tap1(2), b1_ref[2], preferred_element_type=jnp.float32)
    out1 = jnp.maximum(acc1 * s1_ref[...] + c1_ref[...], 0.0)

    # ---- conv2 (3x3, stride 1) + BN2 ----------------------------------------
    o1pad[0:B, :] = zeros_mid
    o1pad[(Ho + 1) * B:(Ho + 2) * B, :] = zeros_mid
    o1pad[B:(Ho + 1) * B, :] = out1.astype(mm)
    acc2 = jnp.dot(o1pad[0:M, :], b2_ref[0], preferred_element_type=jnp.float32)
    acc2 += jnp.dot(o1pad[B:B + M, :], b2_ref[1], preferred_element_type=jnp.float32)
    acc2 += jnp.dot(o1pad[2 * B:2 * B + M, :], b2_ref[2],
                    preferred_element_type=jnp.float32)
    out2 = acc2 * s2_ref[...] + c2_ref[...]

    # ---- shortcut: 1x1 conv + BN, or identity --------------------------------
    if has_sc:
        sc = jnp.dot(shortcut_rows(), bsc_ref[...],
                     preferred_element_type=jnp.float32)
        sc = sc * ssc_ref[...] + csc_ref[...]
    else:
        # Identity residual (input is bf16-rounded by the wrapper; documented
        # deviation from the f32 PyTorch residual add).
        sc = shortcut_rows().astype(jnp.float32)

    o_ref[0] = jnp.maximum(out2 + sc, 0.0).astype(o_ref.dtype)


# --------------------------- wrapper-side helpers --------------------------- #

def _round_up(a, m):
    return -(-a // m) * m


def _pick_batch_block(n, ho, *, target_m=256, max_b=32):
    # batch tile B (multiple of 16 for bf16 sublane alignment), aiming B*Ho>=256
    b = _round_up(max(1, pl.cdiv(target_m, ho)), 16)
    return int(min(b, _round_up(n, 16), max_b))


def fold_bn(gamma, beta, mean, var):
    scale = gamma * lax.rsqrt(var + EPS)
    return scale, beta - mean * scale


def _tile_lanes(v, w_out, c_pad):
    # per-channel vector (C,) -> (1, w_out*c_pad) matching lane index wo*c_pad+c
    v = jnp.pad(v.astype(jnp.float32), (0, c_pad - v.shape[0]))
    return jnp.tile(v, w_out).reshape(1, -1)


def _toeplitz_3x3(w_hwio, w_in, w_out, stride):
    """(3,3,Cin,Cout) conv weights -> (3, w_in*Cin, w_out*Cout) block-Toeplitz
    matrices (one per kh tap): kw taps, W zero-padding and the W-stride are all
    folded into the matrix, so the kernel needs one matmul per kh."""
    wi = jnp.arange(w_in)[None, :, None]
    wo = jnp.arange(w_out)[None, None, :]
    kw = jnp.arange(3)[:, None, None]
    sel = (wi == stride * wo + kw - 1).astype(w_hwio.dtype)      # (3, w_in, w_out)
    b = jnp.einsum("kKco,KWw->kWcwo", w_hwio, sel)
    cin, cout = w_hwio.shape[2], w_hwio.shape[3]
    return b.reshape(3, w_in * cin, w_out * cout)


def _toeplitz_1x1(w_io, w_in, w_out, stride):
    """(Cin,Cout) 1x1 conv weights -> (w_in*Cin, w_out*Cout), W-stride folded in."""
    sel = (jnp.arange(w_in)[:, None] ==
           stride * jnp.arange(w_out)[None, :]).astype(w_io.dtype)
    b = jnp.einsum("co,Ww->Wcwo", w_io, sel)
    cin, cout = w_io.shape
    return b.reshape(w_in * cin, w_out * cout)


def prepare_basic_block(params, *, H, W, stride, matmul_dtype=MATMUL_DTYPE):
    """Fold BN running stats and build the block-Toeplitz matmul weights.
    Call ONCE per network (the results are plain device arrays), not per step."""
    assert stride in (1, 2) and H % stride == 0 and W % stride == 0
    cin, cout = params["w1"].shape[2], params["w1"].shape[3]
    has_sc = "w_sc" in params
    if not has_sc:
        assert stride == 1 and cin == cout
    ho, wo = H // stride, W // stride

    # Pad Cout so the output lane dim wo*cout is a multiple of 128 (dense,
    # unmasked stores).  Only when a shortcut conv exists: an identity shortcut
    # ties the output lane layout to the input's.
    cp = cout
    if has_sc and (wo * cout) % 128 != 0 and 128 % wo == 0:
        cp = _round_up(cout, 128 // wo)

    def pad_out(w, axis):
        if cp == cout:
            return w
        pad = [(0, 0)] * w.ndim
        pad[axis] = (0, cp - cout)
        return jnp.pad(w, pad)

    s1, c1 = fold_bn(*params["bn1"])
    s2, c2 = fold_bn(*params["bn2"])
    w1 = pad_out(params["w1"], 3)
    w2 = pad_out(pad_out(params["w2"], 3), 2)
    prep = dict(
        stride=stride, has_sc=has_sc, H=H, W=W, Ho=ho, Wo=wo,
        cin=cin, cout=cout, cout_pad=cp,
        b1=_toeplitz_3x3(w1, W, wo, stride).astype(matmul_dtype),
        b2=_toeplitz_3x3(w2, wo, wo, 1).astype(matmul_dtype),
        s1=_tile_lanes(s1, wo, cp), c1=_tile_lanes(c1, wo, cp),
        s2=_tile_lanes(s2, wo, cp), c2=_tile_lanes(c2, wo, cp),
    )
    if has_sc:
        ssc, csc = fold_bn(*params["bn_sc"])
        prep["bsc"] = _toeplitz_1x1(pad_out(params["w_sc"], 1),
                                    W, wo, stride).astype(matmul_dtype)
        prep["ssc"] = _tile_lanes(ssc, wo, cp)
        prep["csc"] = _tile_lanes(csc, wo, cp)
    return prep


def basic_block_apply(x_slab, prep, *, batch_block, out_dtype=MATMUL_DTYPE):
    """x_slab: (G, H*B, W*Cin) in MATMUL_DTYPE, slab row = h*B + b.
    Returns (G, Ho*B, Wo*cout_pad) in out_dtype (same slab layout, so blocks
    chain without any HBM relayout)."""
    G, HB, X1 = x_slab.shape
    B = batch_block
    stride, has_sc, Ho = prep["stride"], prep["has_sc"], prep["Ho"]
    H = HB // B
    X2 = prep["b1"].shape[-1]
    M = Ho * B
    assert X1 == prep["W"] * prep["cin"] and HB == H * B

    operands = [x_slab, prep["b1"], prep["s1"], prep["c1"],
                prep["b2"], prep["s2"], prep["c2"]]
    in_specs = [
        pl.BlockSpec((1, HB, X1), lambda n: (n, 0, 0)),
        pl.BlockSpec((3, X1, X2), lambda n: (0, 0, 0)),
        pl.BlockSpec((1, X2), lambda n: (0, 0)),
        pl.BlockSpec((1, X2), lambda n: (0, 0)),
        pl.BlockSpec((3, X2, X2), lambda n: (0, 0, 0)),
        pl.BlockSpec((1, X2), lambda n: (0, 0)),
        pl.BlockSpec((1, X2), lambda n: (0, 0)),
    ]
    if has_sc:
        operands += [prep["bsc"], prep["ssc"], prep["csc"]]
        in_specs += [pl.BlockSpec((X1, X2), lambda n: (0, 0)),
                     pl.BlockSpec((1, X2), lambda n: (0, 0)),
                     pl.BlockSpec((1, X2), lambda n: (0, 0))]

    if stride == 1:
        scratch = [pltpu.VMEM(((H + 2) * B, X1), MATMUL_DTYPE)]
        sc_elems = (H + 2) * B * X1
    else:
        scratch = [pltpu.VMEM(((Ho + 1) * B, X1), MATMUL_DTYPE),
                   pltpu.VMEM((Ho * B, X1), MATMUL_DTYPE)]
        sc_elems = (2 * Ho + 1) * B * X1
    scratch.append(pltpu.VMEM(((Ho + 2) * B, X2), MATMUL_DTYPE))
    sc_elems += (Ho + 2) * B * X2

    # Crude VMEM budget: double-buffered operands/outputs + scratch + margin,
    # clamped to stay well inside v7x's 64 MiB per-core VMEM.
    w_elems = int(prep["b1"].size) + int(prep["b2"].size) + \
        (int(prep["bsc"].size) if has_sc else 0)
    est = 2 * (2 * w_elems + 2 * HB * X1 + 4 * M * X2) + 2 * sc_elems
    vmem_limit = int(min(64 * 2 ** 20, max(32 * 2 ** 20, 2 * est)))

    kernel = functools.partial(_basic_block_kernel, stride=stride,
                               has_sc=has_sc, batch_block=B)
    return pl.pallas_call(
        kernel,
        out_shape=jax.ShapeDtypeStruct((G, M, X2), out_dtype),
        grid=(G,),
        in_specs=in_specs,
        out_specs=pl.BlockSpec((1, M, X2), lambda n: (n, 0, 0)),
        scratch_shapes=scratch,
        compiler_params=pltpu.CompilerParams(
            dimension_semantics=("parallel",),
            vmem_limit_bytes=vmem_limit),
    )(*operands)


def basic_block_forward(x_nchw, params, *, stride, prep=None, batch_block=None,
                        out_dtype=jnp.float32):
    """Convenience NCHW entry point.  In a real network the slab layout is kept
    between blocks and prepare_basic_block() is called once, so the transposes
    and Toeplitz construction below do not recur per forward call."""
    N, Cin, H, W = x_nchw.shape
    if prep is None:
        prep = prepare_basic_block(params, H=H, W=W, stride=stride)
    assert prep["cin"] == Cin and prep["H"] == H and prep["W"] == W
    Ho, Wo = prep["Ho"], prep["Wo"]
    cout, cp = prep["cout"], prep["cout_pad"]
    X1 = W * Cin
    B = batch_block or _pick_batch_block(N, Ho)
    Npad = _round_up(N, B)
    G = Npad // B

    # NCHW -> batch-interleaved lane-dense slab (G, H*B, W*Cin), bf16.
    x = jnp.transpose(x_nchw, (2, 0, 3, 1)).reshape(H, N, X1)
    if Npad != N:
        x = jnp.pad(x, ((0, 0), (0, Npad - N), (0, 0)))
    x = x.reshape(H, G, B, X1).transpose(1, 0, 2, 3).reshape(G, H * B, X1)
    x = x.astype(MATMUL_DTYPE)

    out_slab = basic_block_apply(x, prep, batch_block=B, out_dtype=out_dtype)

    out = out_slab.reshape(G, Ho, B, Wo, cp).transpose(0, 2, 4, 1, 3)
    return out.reshape(Npad, cp, Ho, Wo)[:N, :cout]          # -> NCHW, unpad


# ----------------------- plain-JAX references (check) ----------------------- #

def _reference_forward(x_nchw, params, *, stride, matmul_dtype=None):
    # matmul_dtype=None     -> exact f32 PyTorch semantics
    # matmul_dtype=bfloat16 -> same operand rounding as the kernel's MXU path
    def prep(a):
        return a if matmul_dtype is None else a.astype(matmul_dtype).astype(jnp.float32)

    def conv(x, w_hwio, s, pad):
        return lax.conv_general_dilated(
            prep(x), prep(w_hwio), (s, s), [(pad, pad), (pad, pad)],
            dimension_numbers=("NCHW", "HWIO", "NCHW"))

    def bn(x, gamma, beta, mean, var):
        inv = gamma * lax.rsqrt(var + EPS)
        return x * inv[None, :, None, None] + (beta - mean * inv)[None, :, None, None]

    out = jax.nn.relu(bn(conv(x_nchw, params["w1"], stride, 1), *params["bn1"]))
    out = bn(conv(out, params["w2"], 1, 1), *params["bn2"])
    if "w_sc" in params:
        sc = bn(conv(x_nchw, params["w_sc"][None, None], stride, 0), *params["bn_sc"])
    else:
        sc = prep(x_nchw)
    return jax.nn.relu(out + sc)


# ----------------------------------- main ----------------------------------- #

def _make_params(key, in_planes, planes, stride):
    ks = jax.random.split(key, 8)

    def bn_params(k, c):
        k1, k2, k3, k4 = jax.random.split(k, 4)
        gamma = jax.random.uniform(k1, (c,), jnp.float32, 0.5, 1.5)
        beta = 0.1 * jax.random.normal(k2, (c,), jnp.float32)
        mean = 0.1 * jax.random.normal(k3, (c,), jnp.float32)
        var = jax.random.uniform(k4, (c,), jnp.float32, 0.5, 1.5)
        return (gamma, beta, mean, var)

    params = {
        "w1": 0.2 * jax.random.normal(ks[0], (3, 3, in_planes, planes), jnp.float32),
        "bn1": bn_params(ks[1], planes),
        "w2": 0.2 * jax.random.normal(ks[2], (3, 3, planes, planes), jnp.float32),
        "bn2": bn_params(ks[3], planes),
    }
    if stride != 1 or in_planes != planes:
        params["w_sc"] = 0.2 * jax.random.normal(ks[4], (in_planes, planes), jnp.float32)
        params["bn_sc"] = bn_params(ks[5], planes)
    return params, ks[6]


if __name__ == "__main__":
    key = jax.random.PRNGKey(0)

    # config 1: downsampling block (stride 2, 1x1-conv shortcut), x = (2,4,16,16)
    # config 2: identity block (stride 1, no shortcut conv)
    for (in_planes, planes, stride, N, H, W) in [(4, 8, 2, 2, 16, 16),
                                                 (8, 8, 1, 2, 16, 16)]:
        params, kx = _make_params(key, in_planes, planes, stride)
        x = jax.random.normal(kx, (N, in_planes, H, W), jnp.float32)  # NCHW

        out = jax.block_until_ready(basic_block_forward(x, params, stride=stride))
        assert out.shape == (N, planes, H // stride, W // stride), out.shape

        # tight check against a reference fed the same bf16-rounded matmul inputs
        ref_mm = _reference_forward(x, params, stride=stride, matmul_dtype=MATMUL_DTYPE)
        assert jnp.allclose(out, ref_mm, atol=2e-2, rtol=2e-2), \
            float(jnp.max(jnp.abs(out - ref_mm)))

        # loose sanity check against the exact f32 reference (bf16 MXU operands only)
        ref_f32 = _reference_forward(x, params, stride=stride)
        assert jnp.allclose(out, ref_f32, atol=5e-1, rtol=1e-1), \
            float(jnp.max(jnp.abs(out - ref_f32)))

    print("KERNEL_OK")
</pallas_src>

<mosaic_0001>
module attributes {stable_mosaic.version = 11 : i64} {
  func.func @_basic_block_kernel(%arg0: i32, %arg1: memref<1x256x64xbf16, #tpu.memory_space<vmem>>, %arg2: memref<3x64x128xbf16, #tpu.memory_space<vmem>>, %arg3: memref<1x128xf32, #tpu.memory_space<vmem>>, %arg4: memref<1x128xf32, #tpu.memory_space<vmem>>, %arg5: memref<3x128x128xbf16, #tpu.memory_space<vmem>>, %arg6: memref<1x128xf32, #tpu.memory_space<vmem>>, %arg7: memref<1x128xf32, #tpu.memory_space<vmem>>, %arg8: memref<64x128xbf16, #tpu.memory_space<vmem>>, %arg9: memref<1x128xf32, #tpu.memory_space<vmem>>, %arg10: memref<1x128xf32, #tpu.memory_space<vmem>>, %arg11: memref<1x128x128xf32, #tpu.memory_space<vmem>>, %arg12: memref<144x64xbf16, #tpu.memory_space<vmem>>, %arg13: memref<128x64xbf16, #tpu.memory_space<vmem>>, %arg14: memref<160x128xbf16, #tpu.memory_space<vmem>>) attributes {dimension_semantics = [#tpu.dimension_semantics<parallel>], iteration_bounds = array<i64: 1>, scalar_prefetch = 0 : i64, scratch_operands = 3 : i64, tpu.core_type = #tpu.core_type<tc>, window_params = [{transform_indices = @transform_0, window_bounds = array<i64: 1, 256, 64>}, {pipeline_mode = #tpu.pipeline_mode<synchronous>, transform_indices = @transform_1, window_bounds = array<i64: 3, 64, 128>}, {pipeline_mode = #tpu.pipeline_mode<synchronous>, transform_indices = @transform_2, window_bounds = array<i64: 1, 128>}, {pipeline_mode = #tpu.pipeline_mode<synchronous>, transform_indices = @transform_3, window_bounds = array<i64: 1, 128>}, {pipeline_mode = #tpu.pipeline_mode<synchronous>, transform_indices = @transform_4, window_bounds = array<i64: 3, 128, 128>}, {pipeline_mode = #tpu.pipeline_mode<synchronous>, transform_indices = @transform_5, window_bounds = array<i64: 1, 128>}, {pipeline_mode = #tpu.pipeline_mode<synchronous>, transform_indices = @transform_6, window_bounds = array<i64: 1, 128>}, {pipeline_mode = #tpu.pipeline_mode<synchronous>, transform_indices = @transform_7, window_bounds = array<i64: 64, 128>}, {pipeline_mode = #tpu.pipeline_mode<synchronous>, transform_indices = @transform_8, window_bounds = array<i64: 1, 128>}, {pipeline_mode = #tpu.pipeline_mode<synchronous>, transform_indices = @transform_9, window_bounds = array<i64: 1, 128>}, {transform_indices = @transform_10, window_bounds = array<i64: 1, 128, 128>}]} {
    %cst = arith.constant 0.000000e+00 : bf16
    %0 = vector.broadcast %cst : bf16 to vector<16x64xbf16>
    %cst_0 = arith.constant 0.000000e+00 : bf16
    %1 = vector.broadcast %cst_0 : bf16 to vector<16x128xbf16>
    %c0 = arith.constant 0 : index
    %c0_1 = arith.constant 0 : index
    %2 = vector.load %arg12[%c0, %c0_1] : memref<144x64xbf16, #tpu.memory_space<vmem>>, vector<16x64xbf16>
    tpu.vector_store %arg12[%c0, %c0_1], %0 {strides = array<i32>} : memref<144x64xbf16, #tpu.memory_space<vmem>>, vector<16x64xbf16>,
    %c0_2 = arith.constant 0 : index
    %c0_3 = arith.constant 0 : index
    %c0_4 = arith.constant 0 : index
    %3 = vector.load %arg1[%c0_2, %c0_3, %c0_4] : memref<1x256x64xbf16, #tpu.memory_space<vmem>>, vector<1x16x64xbf16>
    %4 = vector.shape_cast %3 : vector<1x16x64xbf16> to vector<16x64xbf16>
    %c0_5 = arith.constant 0 : index
    %c0_6 = arith.constant 0 : index
    %5 = vector.load %arg13[%c0_5, %c0_6] : memref<128x64xbf16, #tpu.memory_space<vmem>>, vector<16x64xbf16>
    tpu.vector_store %arg13[%c0_5, %c0_6], %4 {strides = array<i32>} : memref<128x64xbf16, #tpu.memory_space<vmem>>, vector<16x64xbf16>,
    %c0_7 = arith.constant 0 : index
    %c16 = arith.constant 16 : index
    %c0_8 = arith.constant 0 : index
    %6 = vector.load %arg1[%c0_7, %c16, %c0_8] : memref<1x256x64xbf16, #tpu.memory_space<vmem>>, vector<1x16x64xbf16>
    %7 = vector.shape_cast %6 : vector<1x16x64xbf16> to vector<16x64xbf16>
    %c16_9 = arith.constant 16 : index
    %c0_10 = arith.constant 0 : index
    %8 = vector.load %arg12[%c16_9, %c0_10] : memref<144x64xbf16, #tpu.memory_space<vmem>>, vector<16x64xbf16>
    tpu.vector_store %arg12[%c16_9, %c0_10], %7 {strides = array<i32>} : memref<144x64xbf16, #tpu.memory_space<vmem>>, vector<16x64xbf16>,
    %c0_11 = arith.constant 0 : index
    %c32 = arith.constant 32 : index
    %c0_12 = arith.constant 0 : index
    %9 = vector.load %arg1[%c0_11, %c32, %c0_12] : memref<1x256x64xbf16, #tpu.memory_space<vmem>>, vector<1x16x64xbf16>
    %10 = vector.shape_cast %9 : vector<1x16x64xbf16> to vector<16x64xbf16>
    %c16_13 = arith.constant 16 : index
    %c0_14 = arith.constant 0 : index
    %11 = vector.load %arg13[%c16_13, %c0_14] : memref<128x64xbf16, #tpu.memory_space<vmem>>, vector<16x64xbf16>
    tpu.vector_store %arg13[%c16_13, %c0_14], %10 {strides = array<i32>} : memref<128x64xbf16, #tpu.memory_space<vmem>>, vector<16x64xbf16>,
    %c0_15 = arith.constant 0 : index
    %c48 = arith.constant 48 : index
    %c0_16 = arith.constant 0 : index
    %12 = vector.load %arg1[%c0_15, %c48, %c0_16] : memref<1x256x64xbf16, #tpu.memory_space<vmem>>, vector<1x16x64xbf16>
    %13 = vector.shape_cast %12 : vector<1x16x64xbf16> to vector<16x64xbf16>
    %c32_17 = arith.constant 32 : index
    %c0_18 = arith.constant 0 : index
    %14 = vector.load %arg12[%c32_17, %c0_18] : memref<144x64xbf16, #tpu.memory_space<vmem>>, vector<16x64xbf16>
    tpu.vector_store %arg12[%c32_17, %c0_18], %13 {strides = array<i32>} : memref<144x64xbf16, #tpu.memory_space<vmem>>, vector<16x64xbf16>,
    %c0_19 = arith.constant 0 : index
    %c64 = arith.constant 64 : index
    %c0_20 = arith.constant 0 : index
    %15 = vector.load %arg1[%c0_19, %c64, %c0_20] : memref<1x256x64xbf16, #tpu.memory_space<vmem>>, vector<1x16x64xbf16>
    %16 = vector.shape_cast %15 : vector<1x16x64xbf16> to vector<16x64xbf16>
    %c32_21 = arith.constant 32 : index
    %c0_22 = arith.constant 0 : index
    %17 = vector.load %arg13[%c32_21, %c0_22] : memref<128x64xbf16, #tpu.memory_space<vmem>>, vector<16x64xbf16>
    tpu.vector_store %arg13[%c32_21, %c0_22], %16 {strides = array<i32>} : memref<128x64xbf16, #tpu.memory_space<vmem>>, vector<16x64xbf16>,
    %c0_23 = arith.constant 0 : index
    %c80 = arith.constant 80 : index
    %c0_24 = arith.constant 0 : index
    %18 = vector.load %arg1[%c0_23, %c80, %c0_24] : memref<1x256x64xbf16, #tpu.memory_space<vmem>>, vector<1x16x64xbf16>
    %19 = vector.shape_cast %18 : vector<1x16x64xbf16> to vector<16x64xbf16>
    %c48_25 = arith.constant 48 : index
    %c0_26 = arith.constant 0 : index
    %20 = vector.load %arg12[%c48_25, %c0_26] : memref<144x64xbf16, #tpu.memory_space<vmem>>, vector<16x64xbf16>
    tpu.vector_store %arg12[%c48_25, %c0_26], %19 {strides = array<i32>} : memref<144x64xbf16, #tpu.memory_space<vmem>>, vector<16x64xbf16>,
    %c0_27 = arith.constant 0 : index
    %c96 = arith.constant 96 : index
    %c0_28 = arith.constant 0 : index
    %21 = vector.load %arg1[%c0_27, %c96, %c0_28] : memref<1x256x64xbf16, #tpu.memory_space<vmem>>, vector<1x16x64xbf16>
    %22 = vector.shape_cast %21 : vector<1x16x64xbf16> to vector<16x64xbf16>
    %c48_29 = arith.constant 48 : index
    %c0_30 = arith.constant 0 : index
    %23 = vector.load %arg13[%c48_29, %c0_30] : memref<128x64xbf16, #tpu.memory_space<vmem>>, vector<16x64xbf16>
    tpu.vector_store %arg13[%c48_29, %c0_30], %22 {strides = array<i32>} : memref<128x64xbf16, #tpu.memory_space<vmem>>, vector<16x64xbf16>,
    %c0_31 = arith.constant 0 : index
    %c112 = arith.constant 112 : index
    %c0_32 = arith.constant 0 : index
    %24 = vector.load %arg1[%c0_31, %c112, %c0_32] : memref<1x256x64xbf16, #tpu.memory_space<vmem>>, vector<1x16x64xbf16>
    %25 = vector.shape_cast %24 : vector<1x16x64xbf16> to vector<16x64xbf16>
    %c64_33 = arith.constant 64 : index
    %c0_34 = arith.constant 0 : index
    %26 = vector.load %arg12[%c64_33, %c0_34] : memref<144x64xbf16, #tpu.memory_space<vmem>>, vector<16x64xbf16>
    tpu.vector_store %arg12[%c64_33, %c0_34], %25 {strides = array<i32>} : memref<144x64xbf16, #tpu.memory_space<vmem>>, vector<16x64xbf16>,
    %c0_35 = arith.constant 0 : index
    %c128 = arith.constant 128 : index
    %c0_36 = arith.constant 0 : index
    %27 = vector.load %arg1[%c0_35, %c128, %c0_36] : memref<1x256x64xbf16, #tpu.memory_space<vmem>>, vector<1x16x64xbf16>
    %28 = vector.shape_cast %27 : vector<1x16x64xbf16> to vector<16x64xbf16>
    %c64_37 = arith.constant 64 : index
    %c0_38 = arith.constant 0 : index
    %29 = vector.load %arg13[%c64_37, %c0_38] : memref<128x64xbf16, #tpu.memory_space<vmem>>, vector<16x64xbf16>
    tpu.vector_store %arg13[%c64_37, %c0_38], %28 {strides = array<i32>} : memref<128x64xbf16, #tpu.memory_space<vmem>>, vector<16x64xbf16>,
    %c0_39 = arith.constant 0 : index
    %c144 = arith.constant 144 : index
    %c0_40 = arith.constant 0 : index
    %30 = vector.load %arg1[%c0_39, %c144, %c0_40] : memref<1x256x64xbf16, #tpu.memory_space<vmem>>, vector<1x16x64xbf16>
    %31 = vector.shape_cast %30 : vector<1x16x64xbf16> to vector<16x64xbf16>
    %c80_41 = arith.constant 80 : index
    %c0_42 = arith.constant 0 : index
    %32 = vector.load %arg12[%c80_41, %c0_42] : memref<144x64xbf16, #tpu.memory_space<vmem>>, vector<16x64xbf16>
    tpu.vector_store %arg12[%c80_41, %c0_42], %31 {strides = array<i32>} : memref<144x64xbf16, #tpu.memory_space<vmem>>, vector<16x64xbf16>,
    %c0_43 = arith.constant 0 : index
    %c160 = arith.constant 160 : index
    %c0_44 = arith.constant 0 : index
    %33 = vector.load %arg1[%c0_43, %c160, %c0_44] : memref<1x256x64xbf16, #tpu.memory_space<vmem>>, vector<1x16x64xbf16>
    %34 = vector.shape_cast %33 : vector<1x16x64xbf16> to vector<16x64xbf16>
    %c80_45 = arith.constant 80 : index
    %c0_46 = arith.constant 0 : index
    %35 = vector.load %arg13[%c80_45, %c0_46] : memref<128x64xbf16, #tpu.memory_space<vmem>>, vector<16x64xbf16>
    tpu.vector_store %arg13[%c80_45, %c0_46], %34 {strides = array<i32>} : memref<128x64xbf16, #tpu.memory_space<vmem>>, vector<16x64xbf16>,
    %c0_47 = arith.constant 0 : index
    %c176 = arith.constant 176 : index
    %c0_48 = arith.constant 0 : index
    %36 = vector.load %arg1[%c0_47, %c176, %c0_48] : memref<1x256x64xbf16, #tpu.memory_space<vmem>>, vector<1x16x64xbf16>
    %37 = vector.shape_cast %36 : vector<1x16x64xbf16> to vector<16x64xbf16>
    %c96_49 = arith.constant 96 : index
    %c0_50 = arith.constant 0 : index
    %38 = vector.load %arg12[%c96_49, %c0_50] : memref<144x64xbf16, #tpu.memory_space<vmem>>, vector<16x64xbf16>
    tpu.vector_store %arg12[%c96_49, %c0_50], %37 {strides = array<i32>} : memref<144x64xbf16, #tpu.memory_space<vmem>>, vector<16x64xbf16>,
    %c0_51 = arith.constant 0 : index
    %c192 = arith.constant 192 : index
    %c0_52 = arith.constant 0 : index
    %39 = vector.load %arg1[%c0_51, %c192, %c0_52] : memref<1x256x64xbf16, #tpu.memory_space<vmem>>, vector<1x16x64xbf16>
    %40 = vector.shape_cast %39 : vector<1x16x64xbf16> to vector<16x64xbf16>
    %c96_53 = arith.constant 96 : index
    %c0_54 = arith.constant 0 : index
    %41 = vector.load %arg13[%c96_53, %c0_54] : memref<128x64xbf16, #tpu.memory_space<vmem>>, vector<16x64xbf16>
    tpu.vector_store %arg13[%c96_53, %c0_54], %40 {strides = array<i32>} : memref<128x64xbf16, #tpu.memory_space<vmem>>, vector<16x64xbf16>,
    %c0_55 = arith.constant 0 : index
    %c208 = arith.constant 208 : index
    %c0_56 = arith.constant 0 : index
    %42 = vector.load %arg1[%c0_55, %c208, %c0_56] : memref<1x256x64xbf16, #tpu.memory_space<vmem>>, vector<1x16x64xbf16>
    %43 = vector.shape_cast %42 : vector<1x16x64xbf16> to vector<16x64xbf16>
    %c112_57 = arith.constant 112 : index
    %c0_58 = arith.constant 0 : index
    %44 = vector.load %arg12[%c112_57, %c0_58] : memref<144x64xbf16, #tpu.memory_space<vmem>>, vector<16x64xbf16>
    tpu.vector_store %arg12[%c112_57, %c0_58], %43 {strides = array<i32>} : memref<144x64xbf16, #tpu.memory_space<vmem>>, vector<16x64xbf16>,
    %c0_59 = arith.constant 0 : index
    %c224 = arith.constant 224 : index
    %c0_60 = arith.constant 0 : index
    %45 = vector.load %arg1[%c0_59, %c224, %c0_60] : memref<1x256x64xbf16, #tpu.memory_space<vmem>>, vector<1x16x64xbf16>
    %46 = vector.shape_cast %45 : vector<1x16x64xbf16> to vector<16x64xbf16>
    %c112_61 = arith.constant 112 : index
    %c0_62 = arith.constant 0 : index
    %47 = vector.load %arg13[%c112_61, %c0_62] : memref<128x64xbf16, #tpu.memory_space<vmem>>, vector<16x64xbf16>
    tpu.vector_store %arg13[%c112_61, %c0_62], %46 {strides = array<i32>} : memref<128x64xbf16, #tpu.memory_space<vmem>>, vector<16x64xbf16>,
    %c0_63 = arith.constant 0 : index
    %c240 = arith.constant 240 : index
    %c0_64 = arith.constant 0 : index
    %48 = vector.load %arg1[%c0_63, %c240, %c0_64] : memref<1x256x64xbf16, #tpu.memory_space<vmem>>, vector<1x16x64xbf16>
    %49 = vector.shape_cast %48 : vector<1x16x64xbf16> to vector<16x64xbf16>
    %c128_65 = arith.constant 128 : index
    %c0_66 = arith.constant 0 : index
    %50 = vector.load %arg12[%c128_65, %c0_66] : memref<144x64xbf16, #tpu.memory_space<vmem>>, vector<16x64xbf16>
    tpu.vector_store %arg12[%c128_65, %c0_66], %49 {strides = array<i32>} : memref<144x64xbf16, #tpu.memory_space<vmem>>, vector<16x64xbf16>,
    %c0_67 = arith.constant 0 : index
    %c0_68 = arith.constant 0 : index
    %51 = vector.load %arg12[%c0_67, %c0_68] : memref<144x64xbf16, #tpu.memory_space<vmem>>, vector<128x64xbf16>
    %c0_69 = arith.constant 0 : index
    %c0_70 = arith.constant 0 : index
    %c0_71 = arith.constant 0 : index
    %52 = vector.load %arg2[%c0_69, %c0_70, %c0_71] : memref<3x64x128xbf16, #tpu.memory_space<vmem>>, vector<1x64x128xbf16>
    %53 = vector.shape_cast %52 : vector<1x64x128xbf16> to vector<64x128xbf16>
    %cst_72 = arith.constant dense<0.000000e+00> : vector<128x128xf32>
    %54 = tpu.matmul %51, %53, %cst_72 {dimension_numbers = #tpu.dot_dimension_numbers<[1], [0], [0], [1], [0, 0, 1, 1], [], []>} : vector<128x64xbf16>, vector<64x128xbf16>, vector<128x128xf32> -> vector<128x128xf32>
    %c0_73 = arith.constant 0 : index
    %c0_74 = arith.constant 0 : index
    %55 = vector.load %arg13[%c0_73, %c0_74] : memref<128x64xbf16, #tpu.memory_space<vmem>>, vector<128x64xbf16>
    %c1 = arith.constant 1 : index
    %c0_75 = arith.constant 0 : index
    %c0_76 = arith.constant 0 : index
    %56 = vector.load %arg2[%c1, %c0_75, %c0_76] : memref<3x64x128xbf16, #tpu.memory_space<vmem>>, vector<1x64x128xbf16>
    %57 = vector.shape_cast %56 : vector<1x64x128xbf16> to vector<64x128xbf16>
    %cst_77 = arith.constant dense<0.000000e+00> : vector<128x128xf32>
    %58 = tpu.matmul %55, %57, %cst_77 {dimension_numbers = #tpu.dot_dimension_numbers<[1], [0], [0], [1], [0, 0, 1, 1], [], []>} : vector<128x64xbf16>, vector<64x128xbf16>, vector<128x128xf32> -> vector<128x128xf32>
    %59 = arith.addf %54, %58 : vector<128x128xf32>
    %c16_78 = arith.constant 16 : index
    %c0_79 = arith.constant 0 : index
    %60 = vector.load %arg12[%c16_78, %c0_79] : memref<144x64xbf16, #tpu.memory_space<vmem>>, vector<128x64xbf16>
    %c2 = arith.constant 2 : index
    %c0_80 = arith.constant 0 : index
    %c0_81 = arith.constant 0 : index
    %61 = vector.load %arg2[%c2, %c0_80, %c0_81] : memref<3x64x128xbf16, #tpu.memory_space<vmem>>, vector<1x64x128xbf16>
    %62 = vector.shape_cast %61 : vector<1x64x128xbf16> to vector<64x128xbf16>
    %cst_82 = arith.constant dense<0.000000e+00> : vector<128x128xf32>
    %63 = tpu.matmul %60, %62, %cst_82 {dimension_numbers = #tpu.dot_dimension_numbers<[1], [0], [0], [1], [0, 0, 1, 1], [], []>} : vector<128x64xbf16>, vector<64x128xbf16>, vector<128x128xf32> -> vector<128x128xf32>
    %64 = arith.addf %59, %63 : vector<128x128xf32>
    %c0_83 = arith.constant 0 : index
    %c0_84 = arith.constant 0 : index
    %65 = vector.load %arg3[%c0_83, %c0_84] : memref<1x128xf32, #tpu.memory_space<vmem>>, vector<1x128xf32>
    %66 = vector.broadcast %65 : vector<1x128xf32> to vector<128x128xf32>
    %67 = arith.mulf %64, %66 : vector<128x128xf32>
    %c0_85 = arith.constant 0 : index
    %c0_86 = arith.constant 0 : index
    %68 = vector.load %arg4[%c0_85, %c0_86] : memref<1x128xf32, #tpu.memory_space<vmem>>, vector<1x128xf32>
    %69 = vector.broadcast %68 : vector<1x128xf32> to vector<128x128xf32>
    %70 = arith.addf %67, %69 : vector<128x128xf32>
    %cst_87 = arith.constant 0.000000e+00 : f32
    %71 = vector.broadcast %cst_87 : f32 to vector<128x128xf32>
    %72 = arith.maximumf %70, %71 : vector<128x128xf32>
    %c0_88 = arith.constant 0 : index
    %c0_89 = arith.constant 0 : index
    %73 = vector.load %arg14[%c0_88, %c0_89] : memref<160x128xbf16, #tpu.memory_space<vmem>>, vector<16x128xbf16>
    tpu.vector_store %arg14[%c0_88, %c0_89], %1 {strides = array<i32>} : memref<160x128xbf16, #tpu.memory_space<vmem>>, vector<16x128xbf16>,
    %c144_90 = arith.constant 144 : index
    %c0_91 = arith.constant 0 : index
    %74 = vector.load %arg14[%c144_90, %c0_91] : memref<160x128xbf16, #tpu.memory_space<vmem>>, vector<16x128xbf16>
    tpu.vector_store %arg14[%c144_90, %c0_91], %1 {strides = array<i32>} : memref<160x128xbf16, #tpu.memory_space<vmem>>, vector<16x128xbf16>,
    %75 = arith.truncf %72 : vector<128x128xf32> to vector<128x128xbf16>
    %c16_92 = arith.constant 16 : index
    %c0_93 = arith.constant 0 : index
    %76 = vector.load %arg14[%c16_92, %c0_93] : memref<160x128xbf16, #tpu.memory_space<vmem>>, vector<128x128xbf16>
    tpu.vector_store %arg14[%c16_92, %c0_93], %75 {strides = array<i32>} : memref<160x128xbf16, #tpu.memory_space<vmem>>, vector<128x128xbf16>,
    %c0_94 = arith.constant 0 : index
    %c0_95 = arith.constant 0 : index
    %77 = vector.load %arg14[%c0_94, %c0_95] : memref<160x128xbf16, #tpu.memory_space<vmem>>, vector<128x128xbf16>
    %c0_96 = arith.constant 0 : index
    %c0_97 = arith.constant 0 : index
    %c0_98 = arith.constant 0 : index
    %78 = vector.load %arg5[%c0_96, %c0_97, %c0_98] : memref<3x128x128xbf16, #tpu.memory_space<vmem>>, vector<1x128x128xbf16>
    %79 = vector.shape_cast %78 : vector<1x128x128xbf16> to vector<128x128xbf16>
    %cst_99 = arith.constant dense<0.000000e+00> : vector<128x128xf32>
    %80 = tpu.matmul %77, %79, %cst_99 {dimension_numbers = #tpu.dot_dimension_numbers<[1], [0], [0], [1], [0, 0, 1, 1], [], []>} : vector<128x128xbf16>, vector<128x128xbf16>, vector<128x128xf32> -> vector<128x128xf32>
    %c16_100 = arith.constant 16 : index
    %c0_101 = arith.constant 0 : index
    %81 = vector.load %arg14[%c16_100, %c0_101] : memref<160x128xbf16, #tpu.memory_space<vmem>>, vector<128x128xbf16>
    %c1_102 = arith.constant 1 : index
    %c0_103 = arith.constant 0 : index
    %c0_104 = arith.constant 0 : index
    %82 = vector.load %arg5[%c1_102, %c0_103, %c0_104] : memref<3x128x128xbf16, #tpu.memory_space<vmem>>, vector<1x128x128xbf16>
    %83 = vector.shape_cast %82 : vector<1x128x128xbf16> to vector<128x128xbf16>
    %cst_105 = arith.constant dense<0.000000e+00> : vector<128x128xf32>
    %84 = tpu.matmul %81, %83, %cst_105 {dimension_numbers = #tpu.dot_dimension_numbers<[1], [0], [0], [1], [0, 0, 1, 1], [], []>} : vector<128x128xbf16>, vector<128x128xbf16>, vector<128x128xf32> -> vector<128x128xf32>
    %85 = arith.addf %80, %84 : vector<128x128xf32>
    %c32_106 = arith.constant 32 : index
    %c0_107 = arith.constant 0 : index
    %86 = vector.load %arg14[%c32_106, %c0_107] : memref<160x128xbf16, #tpu.memory_space<vmem>>, vector<128x128xbf16>
    %c2_108 = arith.constant 2 : index
    %c0_109 = arith.constant 0 : index
    %c0_110 = arith.constant 0 : index
    %87 = vector.load %arg5[%c2_108, %c0_109, %c0_110] : memref<3x128x128xbf16, #tpu.memory_space<vmem>>, vector<1x128x128xbf16>
    %88 = vector.shape_cast %87 : vector<1x128x128xbf16> to vector<128x128xbf16>
    %cst_111 = arith.constant dense<0.000000e+00> : vector<128x128xf32>
    %89 = tpu.matmul %86, %88, %cst_111 {dimension_numbers = #tpu.dot_dimension_numbers<[1], [0], [0], [1], [0, 0, 1, 1], [], []>} : vector<128x128xbf16>, vector<128x128xbf16>, vector<128x128xf32> -> vector<128x128xf32>
    %90 = arith.addf %85, %89 : vector<128x128xf32>
    %c0_112 = arith.constant 0 : index
    %c0_113 = arith.constant 0 : index
    %91 = vector.load %arg6[%c0_112, %c0_113] : memref<1x128xf32, #tpu.memory_space<vmem>>, vector<1x128xf32>
    %92 = vector.broadcast %91 : vector<1x128xf32> to vector<128x128xf32>
    %93 = arith.mulf %90, %92 : vector<128x128xf32>
    %c0_114 = arith.constant 0 : index
    %c0_115 = arith.constant 0 : index
    %94 = vector.load %arg7[%c0_114, %c0_115] : memref<1x128xf32, #tpu.memory_space<vmem>>, vector<1x128xf32>
    %95 = vector.broadcast %94 : vector<1x128xf32> to vector<128x128xf32>
    %96 = arith.addf %93, %95 : vector<128x128xf32>
    %c0_116 = arith.constant 0 : index
    %c0_117 = arith.constant 0 : index
    %97 = vector.load %arg13[%c0_116, %c0_117] : memref<128x64xbf16, #tpu.memory_space<vmem>>, vector<128x64xbf16>
    %c0_118 = arith.constant 0 : index
    %c0_119 = arith.constant 0 : index
    %98 = vector.load %arg8[%c0_118, %c0_119] : memref<64x128xbf16, #tpu.memory_space<vmem>>, vector<64x128xbf16>
    %cst_120 = arith.constant dense<0.000000e+00> : vector<128x128xf32>
    %99 = tpu.matmul %97, %98, %cst_120 {dimension_numbers = #tpu.dot_dimension_numbers<[1], [0], [0], [1], [0, 0, 1, 1], [], []>} : vector<128x64xbf16>, vector<64x128xbf16>, vector<128x128xf32> -> vector<128x128xf32>
    %c0_121 = arith.constant 0 : index
    %c0_122 = arith.constant 0 : index
    %100 = vector.load %arg9[%c0_121, %c0_122] : memref<1x128xf32, #tpu.memory_space<vmem>>, vector<1x128xf32>
    %101 = vector.broadcast %100 : vector<1x128xf32> to vector<128x128xf32>
    %102 = arith.mulf %99, %101 : vector<128x128xf32>
    %c0_123 = arith.constant 0 : index
    %c0_124 = arith.constant 0 : index
    %103 = vector.load %arg10[%c0_123, %c0_124] : memref<1x128xf32, #tpu.memory_space<vmem>>, vector<1x128xf32>
    %104 = vector.broadcast %103 : vector<1x128xf32> to vector<128x128xf32>
    %105 = arith.addf %102, %104 : vector<128x128xf32>
    %106 = arith.addf %96, %105 : vector<128x128xf32>
    %cst_125 = arith.constant 0.000000e+00 : f32
    %107 = vector.broadcast %cst_125 : f32 to vector<128x128xf32>
    %108 = arith.maximumf %106, %107 : vector<128x128xf32>
    %c0_126 = arith.constant 0 : index
    %c0_127 = arith.constant 0 : index
    %c0_128 = arith.constant 0 : index
    %109 = vector.load %arg11[%c0_126, %c0_127, %c0_128] : memref<1x128x128xf32, #tpu.memory_space<vmem>>, vector<1x128x128xf32>
    %110 = vector.shape_cast %109 : vector<1x128x128xf32> to vector<128x128xf32>
    %111 = vector.shape_cast %108 : vector<128x128xf32> to vector<1x128x128xf32>
    tpu.vector_store %arg11[%c0_126, %c0_127, %c0_128], %111 {strides = array<i32>} : memref<1x128x128xf32, #tpu.memory_space<vmem>>, vector<1x128x128xf32>,
    return
  }
  func.func @transform_0(%arg0: i32) -> (i32, i32, i32) {
    %c0_i32 = arith.constant 0 : i32
    %c0_i32_0 = arith.constant 0 : i32
    %c0_i32_1 = arith.constant 0 : i32
    return %arg0, %c0_i32, %c0_i32_0 : i32, i32, i32
  }
  func.func @transform_1(%arg0: i32) -> (i32, i32, i32) {
    %c0_i32 = arith.constant 0 : i32
    %c0_i32_0 = arith.constant 0 : i32
    %c0_i32_1 = arith.constant 0 : i32
    %c0_i32_2 = arith.constant 0 : i32
    return %c0_i32, %c0_i32_0, %c0_i32_1 : i32, i32, i32
  }
  func.func @transform_2(%arg0: i32) -> (i32, i32) {
    %c0_i32 = arith.constant 0 : i32
    %c0_i32_0 = arith.constant 0 : i32
    %c0_i32_1 = arith.constant 0 : i32
    return %c0_i32, %c0_i32_0 : i32, i32
  }
  func.func @transform_3(%arg0: i32) -> (i32, i32) {
    %c0_i32 = arith.constant 0 : i32
    %c0_i32_0 = arith.constant 0 : i32
    %c0_i32_1 = arith.constant 0 : i32
    return %c0_i32, %c0_i32_0 : i32, i32
  }
  func.func @transform_4(%arg0: i32) -> (i32, i32, i32) {
    %c0_i32 = arith.constant 0 : i32
    %c0_i32_0 = arith.constant 0 : i32
    %c0_i32_1 = arith.constant 0 : i32
    %c0_i32_2 = arith.constant 0 : i32
    return %c0_i32, %c0_i32_0, %c0_i32_1 : i32, i32, i32
  }
  func.func @transform_5(%arg0: i32) -> (i32, i32) {
    %c0_i32 = arith.constant 0 : i32
    %c0_i32_0 = arith.constant 0 : i32
    %c0_i32_1 = arith.constant 0 : i32
    return %c0_i32, %c0_i32_0 : i32, i32
  }
  func.func @transform_6(%arg0: i32) -> (i32, i32) {
    %c0_i32 = arith.constant 0 : i32
    %c0_i32_0 = arith.constant 0 : i32
    %c0_i32_1 = arith.constant 0 : i32
    return %c0_i32, %c0_i32_0 : i32, i32
  }
  func.func @transform_7(%arg0: i32) -> (i32, i32) {
    %c0_i32 = arith.constant 0 : i32
    %c0_i32_0 = arith.constant 0 : i32
    %c0_i32_1 = arith.constant 0 : i32
    return %c0_i32, %c0_i32_0 : i32, i32
  }
  func.func @transform_8(%arg0: i32) -> (i32, i32) {
    %c0_i32 = arith.constant 0 : i32
    %c0_i32_0 = arith.constant 0 : i32
    %c0_i32_1 = arith.constant 0 : i32
    return %c0_i32, %c0_i32_0 : i32, i32
  }
  func.func @transform_9(%arg0: i32) -> (i32, i32) {
    %c0_i32 = arith.constant 0 : i32
    %c0_i32_0 = arith.constant 0 : i32
    %c0_i32_1 = arith.constant 0 : i32
    return %c0_i32, %c0_i32_0 : i32, i32
  }
  func.func @transform_10(%arg0: i32) -> (i32, i32, i32) {
    %c0_i32 = arith.constant 0 : i32
    %c0_i32_0 = arith.constant 0 : i32
    %c0_i32_1 = arith.constant 0 : i32
    return %arg0, %c0_i32, %c0_i32_0 : i32, i32, i32
  }
}

</mosaic_0001>

<llo_original>
// kernel: tpu_custom_call.1
$region0: #{tpu_custom_call.1}
  #allocation0 [shape = 'u32[]', space=smem, size = 0x4, offset = 0x4, fixed_abs, tag = 'smem constant byte address 0x4 - core index']
  #allocation1 [shape = 'u32[144,128]{1,0:T(1,128)}', space=vmem, size = 0x12000, scoped, tag = 'internal scratch']
  #allocation2 [shape = 'bf16[144,64]{1,0:T(16,128)(2,1)}', space=vmem, size = 0x9000, scoped, tag = 'scratch operand']
  #allocation3 [shape = 'bf16[128,64]{1,0:T(16,128)(2,1)}', space=vmem, size = 0x8000, scoped, tag = 'scratch operand']
  #allocation4 [shape = 'bf16[160,128]{1,0:T(16,128)(2,1)}', space=vmem, size = 0xa000, scoped, tag = 'scratch operand']
  %s0 = inlined_call_operand.vmem [shape: bf16[1,256,64], index: 0, kind: input, shape index: {}]
  %s1 = inlined_call_operand.hbm [shape: bf16[3,64,128], index: 1, kind: input, shape index: {}]
  %s2 = inlined_call_operand.vmem [shape: f32[1,128], index: 2, kind: input, shape index: {}]
  %s3 = inlined_call_operand.vmem [shape: f32[1,128], index: 3, kind: input, shape index: {}]
  %s4 = inlined_call_operand.vmem [shape: bf16[3,128,128], index: 4, kind: input, shape index: {}]
  %s5 = inlined_call_operand.vmem [shape: f32[1,128], index: 5, kind: input, shape index: {}]
  %s6 = inlined_call_operand.vmem [shape: f32[1,128], index: 6, kind: input, shape index: {}]
  %s7 = inlined_call_operand.hbm [shape: bf16[64,128], index: 7, kind: input, shape index: {}]
  %s8 = inlined_call_operand.vmem [shape: f32[1,128], index: 8, kind: input, shape index: {}]
  %s9 = inlined_call_operand.vmem [shape: f32[1,128], index: 9, kind: input, shape index: {}]
  %s10 = inlined_call_operand.hbm [shape: f32[1,128,128], index: 10, kind: output, shape index: {}]
  %s11 = sld [smem:[#allocation0]]
  $region58: #{tpu_custom_call.1} parent=0
    _
  %s13 = ssub.s32 1, %s11
  %s14 = scalar_select 0, %s13, %s11
  $region1: #{tpu_custom_call.1} parent=0
    #allocation5 [shape = 'u8[49152]{0}', space=vmem, size = 0xc000, scoped, tag = 'input window, operand 1, single buffered']
    #allocation6 [shape = 's32[1]{0}', space=sflag, size = 0x4, scoped, tag = 'scoped memory for tpu_custom_call.1']
    #allocation7 [shape = 's32[1]{0}', space=sflag, size = 0x4, scoped, tag = 'scoped memory for tpu_custom_call.1']
    #allocation8 [shape = 'u8[16384]{0}', space=vmem, size = 0x4000, scoped, tag = 'input window, operand 7, single buffered']
    #allocation9 [shape = 's32[1]{0}', space=sflag, size = 0x4, scoped, tag = 'scoped memory for tpu_custom_call.1']
    #allocation10 [shape = 'u8[65536]{0}', space=vmem, size = 0x10000, scoped, tag = 'output window, operand 0, single buffered']
    %15 = vsyncpa [#allocation6], 0
    %16 = vsyncpa [#allocation9], 0
    %17 = vsyncpa [#allocation7], 0
    // Predicated region
    $region2: #{tpu_custom_call.1} parent=1 // pred_check
      _
    $region3: #{tpu_custom_call.1} parent=1 // pred_check_branch
      %19 = sbr.rel (0) target = $region5
    $region4: #{tpu_custom_call.1} parent=1 // pred_region
      _
    $region5: #{tpu_custom_call.1} parent=1 // pred_fallthru
      _
    // Predicated region
    $region6: #{tpu_custom_call.1} parent=1 // pred_check
      _
    $region7: #{tpu_custom_call.1} parent=1 // pred_check_branch
      %21 = sbr.rel (0) target = $region9
    $region8: #{tpu_custom_call.1} parent=1 // pred_region
      %s23 = ssub.s32 1536, 1536
      %24 = vsyncadd [#allocation6], %s23
      %s25 = sshll.u32 [#allocation5], 4
      %s26 = int_to_ptr.vmem [resolvable:$true] %s25
      %31 = dma.hbm_to_vmem [thread:$0]  %s1, 1536, %s26, [#allocation6], 64, 64, 4
    $region9: #{tpu_custom_call.1} parent=1 // pred_fallthru
      _
    // Predicated region
    $region10: #{tpu_custom_call.1} parent=1 // pred_check
      _
    $region11: #{tpu_custom_call.1} parent=1 // pred_check_branch
      %33 = sbr.rel (0) target = $region13
    $region12: #{tpu_custom_call.1} parent=1 // pred_region
      _
    $region13: #{tpu_custom_call.1} parent=1 // pred_fallthru
      _
    // Predicated region
    $region14: #{tpu_custom_call.1} parent=1 // pred_check
      _
    $region15: #{tpu_custom_call.1} parent=1 // pred_check_branch
      %35 = sbr.rel (0) target = $region17
    $region16: #{tpu_custom_call.1} parent=1 // pred_region
      _
    $region17: #{tpu_custom_call.1} parent=1 // pred_fallthru
      _
    // Predicated region
    $region18: #{tpu_custom_call.1} parent=1 // pred_check
      _
    $region19: #{tpu_custom_call.1} parent=1 // pred_check_branch
      %37 = sbr.rel (0) target = $region21
    $region20: #{tpu_custom_call.1} parent=1 // pred_region
      _
    $region21: #{tpu_custom_call.1} parent=1 // pred_fallthru
      _
    // Predicated region
    $region22: #{tpu_custom_call.1} parent=1 // pred_check
      _
    $region23: #{tpu_custom_call.1} parent=1 // pred_check_branch
      %39 = sbr.rel (0) target = $region25
    $region24: #{tpu_custom_call.1} parent=1 // pred_region
      _
    $region25: #{tpu_custom_call.1} parent=1 // pred_fallthru
      _
    // Predicated region
    $region26: #{tpu_custom_call.1} parent=1 // pred_check
      _
    $region27: #{tpu_custom_call.1} parent=1 // pred_check_branch
      %41 = sbr.rel (0) target = $region29
    $region28: #{tpu_custom_call.1} parent=1 // pred_region
      _
    $region29: #{tpu_custom_call.1} parent=1 // pred_fallthru
      _
    // Predicated region
    $region30: #{tpu_custom_call.1} parent=1 // pred_check
      _
    $region31: #{tpu_custom_call.1} parent=1 // pred_check_branch
      %43 = sbr.rel (0) target = $region33
    $region32: #{tpu_custom_call.1} parent=1 // pred_region
      %s45 = ssub.s32 512, 512
      %46 = vsyncadd [#allocation9], %s45
      %s47 = sshll.u32 [#allocation8], 4
      %s48 = int_to_ptr.vmem [resolvable:$true] %s47
      %53 = dma.hbm_to_vmem [thread:$0]  %s7, 512, %s48, [#allocation9], 64, 64, 4
    $region33: #{tpu_custom_call.1} parent=1 // pred_fallthru
      _
    // Predicated region
    $region34: #{tpu_custom_call.1} parent=1 // pred_check
      _
    $region35: #{tpu_custom_call.1} parent=1 // pred_check_branch
      %55 = sbr.rel (0) target = $region37
    $region36: #{tpu_custom_call.1} parent=1 // pred_region
      _
    $region37: #{tpu_custom_call.1} parent=1 // pred_fallthru
      _
    // Predicated region
    $region38: #{tpu_custom_call.1} parent=1 // pred_check
      _
    $region39: #{tpu_custom_call.1} parent=1 // pred_check_branch
      %57 = sbr.rel (0) target = $region41
    $region40: #{tpu_custom_call.1} parent=1 // pred_region
      _
    $region41: #{tpu_custom_call.1} parent=1 // pred_fallthru
      _
    // Predicated region
    $region42: #{tpu_custom_call.1} parent=1 // pred_check
      _
    $region43: #{tpu_custom_call.1} parent=1 // pred_check_branch
      %59 = sbr.rel (0) target = $region45
    $region44: #{tpu_custom_call.1} parent=1 // pred_region
      %60 = dma.done [#allocation6], 1536
    $region45: #{tpu_custom_call.1} parent=1 // pred_fallthru
      _
    // Predicated region
    $region46: #{tpu_custom_call.1} parent=1 // pred_check
      _
    $region47: #{tpu_custom_call.1} parent=1 // pred_check_branch
      %62 = sbr.rel (0) target = $region49
    $region48: #{tpu_custom_call.1} parent=1 // pred_region
      %63 = dma.done [#allocation9], 512
    $region49: #{tpu_custom_call.1} parent=1 // pred_fallthru
      _
    %vm65 = vcmask 523264
    %66 = vst.msk [vmem:[#allocation2] sm:$0xff] %vm65, 0
    %v67 = vld [vmem:[%s0] sm:$0xf]
    %v68 = vld [vmem:[%s0 + $0x4] sm:$0xf]
    %v71 = vunpack.c.l.b16 %v67
    %v72 = vunpack.c.l.b16 %v68
    %v73 = vpack.c.b16 %v72, %v71
    %75 = vst.msk [vmem:[#allocation3] sm:$0xff] %vm65, %v73
    %v76 = vld [vmem:[%s0 + $0x8] sm:$0xf]
    %v77 = vld [vmem:[%s0 + $0xc] sm:$0xf]
    %v80 = vunpack.c.l.b16 %v76
    %v81 = vunpack.c.l.b16 %v77
    %v82 = vpack.c.b16 %v81, %v80
    %84 = vst.msk [vmem:[#allocation2 + $0x8] sm:$0xff] %vm65, %v82
    %v85 = vld [vmem:[%s0 + $0x10] sm:$0xf]
    %v86 = vld [vmem:[%s0 + $0x14] sm:$0xf]
    %v89 = vunpack.c.l.b16 %v85
    %v90 = vunpack.c.l.b16 %v86
    %v91 = vpack.c.b16 %v90, %v89
    %93 = vst.msk [vmem:[#allocation3 + $0x8] sm:$0xff] %vm65, %v91
    %v94 = vld [vmem:[%s0 + $0x18] sm:$0xf]
    %v95 = vld [vmem:[%s0 + $0x1c] sm:$0xf]
    %v98 = vunpack.c.l.b16 %v94
    %v99 = vunpack.c.l.b16 %v95
    %v100 = vpack.c.b16 %v99, %v98
    %102 = vst.msk [vmem:[#allocation2 + $0x10] sm:$0xff] %vm65, %v100
    %v103 = vld [vmem:[%s0 + $0x20] sm:$0xf]
    %v104 = vld [vmem:[%s0 + $0x24] sm:$0xf]
    %v107 = vunpack.c.l.b16 %v103
    %v108 = vunpack.c.l.b16 %v104
    %v109 = vpack.c.b16 %v108, %v107
    %111 = vst.msk [vmem:[#allocation3 + $0x10] sm:$0xff] %vm65, %v109
    %v112 = vld [vmem:[%s0 + $0x28] sm:$0xf]
    %v113 = vld [vmem:[%s0 + $0x2c] sm:$0xf]
    %v116 = vunpack.c.l.b16 %v112
    %v117 = vunpack.c.l.b16 %v113
    %v118 = vpack.c.b16 %v117, %v116
    %120 = vst.msk [vmem:[#allocation2 + $0x18] sm:$0xff] %vm65, %v118
    %v121 = vld [vmem:[%s0 + $0x30] sm:$0xf]
    %v122 = vld [vmem:[%s0 + $0x34] sm:$0xf]
    %v125 = vunpack.c.l.b16 %v121
    %v126 = vunpack.c.l.b16 %v122
    %v127 = vpack.c.b16 %v126, %v125
    %129 = vst.msk [vmem:[#allocation3 + $0x18] sm:$0xff] %vm65, %v127
    %v130 = vld [vmem:[%s0 + $0x38] sm:$0xf]
    %v131 = vld [vmem:[%s0 + $0x3c] sm:$0xf]
    %v134 = vunpack.c.l.b16 %v130
    %v135 = vunpack.c.l.b16 %v131
    %v136 = vpack.c.b16 %v135, %v134
    %138 = vst.msk [vmem:[#allocation2 + $0x20] sm:$0xff] %vm65, %v136
    %v139 = vld [vmem:[%s0 + $0x40] sm:$0xf]
    %v140 = vld [vmem:[%s0 + $0x44] sm:$0xf]
    %v143 = vunpack.c.l.b16 %v139
    %v144 = vunpack.c.l.b16 %v140
    %v145 = vpack.c.b16 %v144, %v143
    %147 = vst.msk [vmem:[#allocation3 + $0x20] sm:$0xff] %vm65, %v145
    %v148 = vld [vmem:[%s0 + $0x48] sm:$0xf]
    %v149 = vld [vmem:[%s0 + $0x4c] sm:$0xf]
    %v152 = vunpack.c.l.b16 %v148
    %v153 = vunpack.c.l.b16 %v149
    %v154 = vpack.c.b16 %v153, %v152
    %156 = vst.msk [vmem:[#allocation2 + $0x28] sm:$0xff] %vm65, %v154
    %v157 = vld [vmem:[%s0 + $0x50] sm:$0xf]
    %v158 = vld [vmem:[%s0 + $0x54] sm:$0xf]
    %v161 = vunpack.c.l.b16 %v157
    %v162 = vunpack.c.l.b16 %v158
    %v163 = vpack.c.b16 %v162, %v161
    %165 = vst.msk [vmem:[#allocation3 + $0x28] sm:$0xff] %vm65, %v163
    %v166 = vld [vmem:[%s0 + $0x58] sm:$0xf]
    %v167 = vld [vmem:[%s0 + $0x5c] sm:$0xf]
    %v170 = vunpack.c.l.b16 %v166
    %v171 = vunpack.c.l.b16 %v167
    %v172 = vpack.c.b16 %v171, %v170
    %174 = vst.msk [vmem:[#allocation2 + $0x30] sm:$0xff] %vm65, %v172
    %v175 = vld [vmem:[%s0 + $0x60] sm:$0xf]
    %v176 = vld [vmem:[%s0 + $0x64] sm:$0xf]
    %v179 = vunpack.c.l.b16 %v175
    %v180 = vunpack.c.l.b16 %v176
    %v181 = vpack.c.b16 %v180, %v179
    %183 = vst.msk [vmem:[#allocation3 + $0x30] sm:$0xff] %vm65, %v181
    %v184 = vld [vmem:[%s0 + $0x68] sm:$0xf]
    %v185 = vld [vmem:[%s0 + $0x6c] sm:$0xf]
    %v188 = vunpack.c.l.b16 %v184
    %v189 = vunpack.c.l.b16 %v185
    %v190 = vpack.c.b16 %v189, %v188
    %192 = vst.msk [vmem:[#allocation2 + $0x38] sm:$0xff] %vm65, %v190
    %v193 = vld [vmem:[%s0 + $0x70] sm:$0xf]
    %v194 = vld [vmem:[%s0 + $0x74] sm:$0xf]
    %v197 = vunpack.c.l.b16 %v193
    %v198 = vunpack.c.l.b16 %v194
    %v199 = vpack.c.b16 %v198, %v197
    %201 = vst.msk [vmem:[#allocation3 + $0x38] sm:$0xff] %vm65, %v199
    %v202 = vld [vmem:[%s0 + $0x78] sm:$0xf]
    %v203 = vld [vmem:[%s0 + $0x7c] sm:$0xf]
    %v206 = vunpack.c.l.b16 %v202
    %v207 = vunpack.c.l.b16 %v203
    %v208 = vpack.c.b16 %v207, %v206
    %210 = vst.msk [vmem:[#allocation2 + $0x40] sm:$0xff] %vm65, %v208
    %v211 = vld [vmem:[#allocation2] sm:$0xff]
    %v212 = vld [vmem:[#allocation2 + $0x8] sm:$0xff]
    %v213 = vld [vmem:[#allocation2 + $0x10] sm:$0xff]
    %v214 = vld [vmem:[#allocation2 + $0x18] sm:$0xff]
    %v215 = vld [vmem:[#allocation2 + $0x20] sm:$0xff]
    %v216 = vld [vmem:[#allocation2 + $0x28] sm:$0xff]
    %v217 = vld [vmem:[#allocation2 + $0x30] sm:$0xff]
    %v218 = vld [vmem:[#allocation2 + $0x38] sm:$0xff]
    %v219 = vld [vmem:[#allocation5] sm:$0xf]
    %v220 = vld [vmem:[#allocation5 + $0x4] sm:$0xf]
    %v221 = vld [vmem:[#allocation5 + $0x8] sm:$0xf]
    %v222 = vld [vmem:[#allocation5 + $0xc] sm:$0xf]
    %v223 = vld [vmem:[#allocation5 + $0x10] sm:$0xf]
    %v224 = vld [vmem:[#allocation5 + $0x14] sm:$0xf]
    %v225 = vld [vmem:[#allocation5 + $0x18] sm:$0xf]
    %v226 = vld [vmem:[#allocation5 + $0x1c] sm:$0xf]
    %v227 = vld [vmem:[#allocation3] sm:$0xff]
    %v228 = vld [vmem:[#allocation3 + $0x8] sm:$0xff]
    %v229 = vld [vmem:[#allocation3 + $0x10] sm:$0xff]
    %v230 = vld [vmem:[#allocation3 + $0x18] sm:$0xff]
    %v231 = vld [vmem:[#allocation3 + $0x20] sm:$0xff]
    %v232 = vld [vmem:[#allocation3 + $0x28] sm:$0xff]
    %v233 = vld [vmem:[#allocation3 + $0x30] sm:$0xff]
    %v234 = vld [vmem:[#allocation3 + $0x38] sm:$0xff]
    %s235 = scalar_lea.vmem [#allocation5], 32
    %v236 = vld [vmem:[%s235] sm:$0xf]
    %v237 = vld [vmem:[%s235 + $0x4] sm:$0xf]
    %v238 = vld [vmem:[%s235 + $0x8] sm:$0xf]
    %v239 = vld [vmem:[%s235 + $0xc] sm:$0xf]
    %v240 = vld [vmem:[%s235 + $0x10] sm:$0xf]
    %v241 = vld [vmem:[%s235 + $0x14] sm:$0xf]
    %v242 = vld [vmem:[%s235 + $0x18] sm:$0xf]
    %v243 = vld [vmem:[%s235 + $0x1c] sm:$0xf]
    %v252 = vunpack.c.l.b16 %v236
    %v253 = vunpack.c.l.b16 %v237
    %v254 = vunpack.c.l.b16 %v238
    %v255 = vunpack.c.l.b16 %v239
    %v256 = vunpack.c.l.b16 %v240
    %v257 = vunpack.c.l.b16 %v241
    %v258 = vunpack.c.l.b16 %v242
    %v259 = vunpack.c.l.b16 %v243
    %v260 = vpack.c.b16 %v253, %v252
    %v261 = vpack.c.b16 %v255, %v254
    %v262 = vpack.c.b16 %v257, %v256
    %v263 = vpack.c.b16 %v259, %v258
    %v269 = vsel %vm65, %v227, 0
    %v272 = vsel %vm65, %v228, 0
    %v275 = vsel %vm65, %v229, 0
    %v278 = vsel %vm65, %v230, 0
    %v281 = vsel %vm65, %v231, 0
    %v284 = vsel %vm65, %v232, 0
    %v287 = vsel %vm65, %v233, 0
    %v290 = vsel %vm65, %v234, 0
    %292 = vmatprep.subr.bf16.mxu0 0
    %293 = vmatpush1.bf16.msra.mxu0 %v260
    %294 = vmatprep.subr.bf16.mxu0 0
    %295 = vmatpush1.bf16.msra.mxu0 %v261
    %296 = vmatprep.subr.bf16.mxu0 0
    %297 = vmatpush1.bf16.msra.mxu0 %v262
    %298 = vmatprep.subr.bf16.mxu0 0
    %299 = vmatpush1.bf16.msra.mxu0 %v263
    %300 = vmatprep.subr.bf16.mxu0 0
    %301 = vmatpush1.bf16.msra.mxu0 0
    %302 = vmatprep.subr.bf16.mxu0 0
    %303 = vmatpush1.bf16.msra.mxu0 0
    %304 = vmatprep.subr.bf16.mxu0 0
    %305 = vmatpush1.bf16.msra.mxu0 0
    %306 = vmatprep.subr.bf16.mxu0 0
    %307 = vmatpush1.bf16.msra.mxu0 0
    %308 = vmatprep.subr.bf16.mxu0 0
    %309 = vmatpush1.bf16.msra.mxu0 0
    %310 = vmatprep.subr.bf16.mxu0 0
    %311 = vmatpush1.bf16.msra.mxu0 0
    %312 = vmatprep.subr.bf16.mxu0 0
    %313 = vmatpush1.bf16.msra.mxu0 0
    %314 = vmatprep.subr.bf16.mxu0 0
    %315 = vmatpush1.bf16.msra.mxu0 0
    %316 = vmatprep.subr.bf16.mxu0 0
    %317 = vmatpush1.bf16.msra.mxu0 0
    %318 = vmatprep.subr.bf16.mxu0 0
    %319 = vmatpush1.bf16.msra.mxu0 0
    %320 = vmatprep.subr.bf16.mxu0 0
    %321 = vmatpush1.bf16.msra.mxu0 0
    %322 = vmatprep.subr.bf16.mxu0 0
    %323 = vmatpush1.bf16.msra.mxu0 0
    %324 = vmatprep.mubr.bf16.mxu0 0
    %325 = vmatmul.mubr.bf16.gmra.mrb[0].mxu0 %v269
    %v326 = vpop.f32.mrb[0].mxu0
    %v327 = vadd.f32 0.0, %v326
    %v328 = vpop.f32.mrb[0].mxu0
    %v329 = vpop.f32.mrb[0].mxu0
    %v330 = vadd.f32 0.0, %v329
    %v331 = vpop.f32.mrb[0].mxu0
    %332 = vmatprep.mubr.bf16.mxu0 0
    %333 = vmatmul.mubr.bf16.gmra.mrb[0].mxu0 %v272
    %v334 = vpop.f32.mrb[0].mxu0
    %v335 = vadd.f32 0.0, %v334
    %v336 = vpop.f32.mrb[0].mxu0
    %v337 = vpop.f32.mrb[0].mxu0
    %v338 = vadd.f32 0.0, %v337
    %v339 = vpop.f32.mrb[0].mxu0
    %340 = vmatprep.mubr.bf16.mxu0 0
    %341 = vmatmul.mubr.bf16.gmra.mrb[0].mxu0 %v275
    %v342 = vpop.f32.mrb[0].mxu0
    %v343 = vadd.f32 0.0, %v342
    %v344 = vpop.f32.mrb[0].mxu0
    %v345 = vpop.f32.mrb[0].mxu0
    %v346 = vadd.f32 0.0, %v345
    %v347 = vpop.f32.mrb[0].mxu0
    %348 = vmatprep.mubr.bf16.mxu0 0
    %349 = vmatmul.mubr.bf16.gmra.mrb[0].mxu0 %v278
    %v350 = vpop.f32.mrb[0].mxu0
    %v351 = vadd.f32 0.0, %v350
    %v352 = vpop.f32.mrb[0].mxu0
    %v353 = vpop.f32.mrb[0].mxu0
    %v354 = vadd.f32 0.0, %v353
    %v355 = vpop.f32.mrb[0].mxu0
    %356 = vmatprep.mubr.bf16.mxu0 0
    %357 = vmatmul.mubr.bf16.gmra.mrb[0].mxu0 %v281
    %v358 = vpop.f32.mrb[0].mxu0
    %v359 = vadd.f32 0.0, %v358
    %v360 = vpop.f32.mrb[0].mxu0
    %v361 = vpop.f32.mrb[0].mxu0
    %v362 = vadd.f32 0.0, %v361
    %v363 = vpop.f32.mrb[0].mxu0
    %364 = vmatprep.mubr.bf16.mxu0 0
    %365 = vmatmul.mubr.bf16.gmra.mrb[0].mxu0 %v284
    %v366 = vpop.f32.mrb[0].mxu0
    %v367 = vadd.f32 0.0, %v366
    %v368 = vpop.f32.mrb[0].mxu0
    %v369 = vpop.f32.mrb[0].mxu0
    %v370 = vadd.f32 0.0, %v369
    %v371 = vpop.f32.mrb[0].mxu0
    %372 = vmatprep.mubr.bf16.mxu0 0
    %373 = vmatmul.mubr.bf16.gmra.mrb[0].mxu0 %v287
    %v374 = vpop.f32.mrb[0].mxu0
    %v375 = vadd.f32 0.0, %v374
    %v376 = vpop.f32.mrb[0].mxu0
    %v377 = vpop.f32.mrb[0].mxu0
    %v378 = vadd.f32 0.0, %v377
    %v379 = vpop.f32.mrb[0].mxu0
    %380 = vmatprep.mubr.bf16.mxu0 0
    %381 = vmatmul.mubr.bf16.gmra.mrb[0].mxu0 %v290
    %v382 = vpop.f32.mrb[0].mxu0
    %v383 = vadd.f32 0.0, %v382
    %v384 = vpop.f32.mrb[0].mxu0
    %v385 = vpop.f32.mrb[0].mxu0
    %v386 = vadd.f32 0.0, %v385
    %v387 = vpop.f32.mrb[0].mxu0
    %388 = vdwg.mxu0
    %v397 = vunpack.c.l.b16 %v219
    %v398 = vunpack.c.l.b16 %v220
    %v399 = vunpack.c.l.b16 %v221
    %v400 = vunpack.c.l.b16 %v222
    %v401 = vunpack.c.l.b16 %v223
    %v402 = vunpack.c.l.b16 %v224
    %v403 = vunpack.c.l.b16 %v225
    %v404 = vunpack.c.l.b16 %v226
    %v405 = vpack.c.b16 %v398, %v397
    %v406 = vpack.c.b16 %v400, %v399
    %v407 = vpack.c.b16 %v402, %v401
    %v408 = vpack.c.b16 %v404, %v403
    %v414 = vsel %vm65, %v211, 0
    %v417 = vsel %vm65, %v212, 0
    %v420 = vsel %vm65, %v213, 0
    %v423 = vsel %vm65, %v214, 0
    %v426 = vsel %vm65, %v215, 0
    %v429 = vsel %vm65, %v216, 0
    %v432 = vsel %vm65, %v217, 0
    %v435 = vsel %vm65, %v218, 0
    %437 = vmatprep.subr.bf16.mxu0 0
    %438 = vmatpush1.bf16.msra.mxu0 %v405
    %439 = vmatprep.subr.bf16.mxu0 0
    %440 = vmatpush1.bf16.msra.mxu0 %v406
    %441 = vmatprep.subr.bf16.mxu0 0
    %442 = vmatpush1.bf16.msra.mxu0 %v407
    %443 = vmatprep.subr.bf16.mxu0 0
    %444 = vmatpush1.bf16.msra.mxu0 %v408
    %445 = vmatprep.subr.bf16.mxu0 0
    %446 = vmatpush1.bf16.msra.mxu0 0
    %447 = vmatprep.subr.bf16.mxu0 0
    %448 = vmatpush1.bf16.msra.mxu0 0
    %449 = vmatprep.subr.bf16.mxu0 0
    %450 = vmatpush1.bf16.msra.mxu0 0
    %451 = vmatprep.subr.bf16.mxu0 0
    %452 = vmatpush1.bf16.msra.mxu0 0
    %453 = vmatprep.subr.bf16.mxu0 0
    %454 = vmatpush1.bf16.msra.mxu0 0
    %455 = vmatprep.subr.bf16.mxu0 0
    %456 = vmatpush1.bf16.msra.mxu0 0
    %457 = vmatprep.subr.bf16.mxu0 0
    %458 = vmatpush1.bf16.msra.mxu0 0
    %459 = vmatprep.subr.bf16.mxu0 0
    %460 = vmatpush1.bf16.msra.mxu0 0
    %461 = vmatprep.subr.bf16.mxu0 0
    %462 = vmatpush1.bf16.msra.mxu0 0
    %463 = vmatprep.subr.bf16.mxu0 0
    %464 = vmatpush1.bf16.msra.mxu0 0
    %465 = vmatprep.subr.bf16.mxu0 0
    %466 = vmatpush1.bf16.msra.mxu0 0
    %467 = vmatprep.subr.bf16.mxu0 0
    %468 = vmatpush1.bf16.msra.mxu0 0
    %469 = vmatprep.mubr.bf16.mxu0 0
    %470 = vmatmul.mubr.bf16.gmra.mrb[0].mxu0 %v414
    %v471 = vpop.f32.mrb[0].mxu0
    %v472 = vadd.f32 %v327, %v471
    %v473 = vpop.f32.mrb[0].mxu0
    %v474 = vpop.f32.mrb[0].mxu0
    %v475 = vadd.f32 %v330, %v474
    %v476 = vpop.f32.mrb[0].mxu0
    %477 = vmatprep.mubr.bf16.mxu0 0
    %478 = vmatmul.mubr.bf16.gmra.mrb[0].mxu0 %v417
    %v479 = vpop.f32.mrb[0].mxu0
    %v480 = vadd.f32 %v335, %v479
    %v481 = vpop.f32.mrb[0].mxu0
    %v482 = vpop.f32.mrb[0].mxu0
    %v483 = vadd.f32 %v338, %v482
    %v484 = vpop.f32.mrb[0].mxu0
    %485 = vmatprep.mubr.bf16.mxu0 0
    %486 = vmatmul.mubr.bf16.gmra.mrb[0].mxu0 %v420
    %v487 = vpop.f32.mrb[0].mxu0
    %v488 = vadd.f32 %v343, %v487
    %v489 = vpop.f32.mrb[0].mxu0
    %v490 = vpop.f32.mrb[0].mxu0
    %v491 = vadd.f32 %v346, %v490
    %v492 = vpop.f32.mrb[0].mxu0
    %493 = vmatprep.mubr.bf16.mxu0 0
    %494 = vmatmul.mubr.bf16.gmra.mrb[0].mxu0 %v423
    %v495 = vpop.f32.mrb[0].mxu0
    %v496 = vadd.f32 %v351, %v495
    %v497 = vpop.f32.mrb[0].mxu0
    %v498 = vpop.f32.mrb[0].mxu0
    %v499 = vadd.f32 %v354, %v498
    %v500 = vpop.f32.mrb[0].mxu0
    %501 = vmatprep.mubr.bf16.mxu0 0
    %502 = vmatmul.mubr.bf16.gmra.mrb[0].mxu0 %v426
    %v503 = vpop.f32.mrb[0].mxu0
    %v504 = vadd.f32 %v359, %v503
    %v505 = vpop.f32.mrb[0].mxu0
    %v506 = vpop.f32.mrb[0].mxu0
    %v507 = vadd.f32 %v362, %v506
    %v508 = vpop.f32.mrb[0].mxu0
    %509 = vmatprep.mubr.bf16.mxu0 0
    %510 = vmatmul.mubr.bf16.gmra.mrb[0].mxu0 %v429
    %v511 = vpop.f32.mrb[0].mxu0
    %v512 = vadd.f32 %v367, %v511
    %v513 = vpop.f32.mrb[0].mxu0
    %v514 = vpop.f32.mrb[0].mxu0
    %v515 = vadd.f32 %v370, %v514
    %v516 = vpop.f32.mrb[0].mxu0
    %517 = vmatprep.mubr.bf16.mxu0 0
    %518 = vmatmul.mubr.bf16.gmra.mrb[0].mxu0 %v432
    %v519 = vpop.f32.mrb[0].mxu0
    %v520 = vadd.f32 %v375, %v519
    %v521 = vpop.f32.mrb[0].mxu0
    %v522 = vpop.f32.mrb[0].mxu0
    %v523 = vadd.f32 %v378, %v522
    %v524 = vpop.f32.mrb[0].mxu0
    %525 = vmatprep.mubr.bf16.mxu0 0
    %526 = vmatmul.mubr.bf16.gmra.mrb[0].mxu0 %v435
    %v527 = vpop.f32.mrb[0].mxu0
    %v528 = vadd.f32 %v383, %v527
    %v529 = vpop.f32.mrb[0].mxu0
    %v530 = vpop.f32.mrb[0].mxu0
    %v531 = vadd.f32 %v386, %v530
    %v532 = vpop.f32.mrb[0].mxu0
    %533 = vdwg.mxu0
    %v534 = vld [vmem:[#allocation2 + $0x8] sm:$0xff]
    %v535 = vld [vmem:[#allocation2 + $0x10] sm:$0xff]
    %v536 = vld [vmem:[#allocation2 + $0x18] sm:$0xff]
    %v537 = vld [vmem:[#allocation2 + $0x20] sm:$0xff]
    %v538 = vld [vmem:[#allocation2 + $0x28] sm:$0xff]
    %v539 = vld [vmem:[#allocation2 + $0x30] sm:$0xff]
    %v540 = vld [vmem:[#allocation2 + $0x38] sm:$0xff]
    %v541 = vld [vmem:[#allocation2 + $0x40] sm:$0xff]
    %s542 = scalar_lea.vmem [#allocation5], 64
    %v543 = vld [vmem:[%s542] sm:$0xf]
    %v544 = vld [vmem:[%s542 + $0x4] sm:$0xf]
    %v545 = vld [vmem:[%s542 + $0x8] sm:$0xf]
    %v546 = vld [vmem:[%s542 + $0xc] sm:$0xf]
    %v547 = vld [vmem:[%s542 + $0x10] sm:$0xf]
    %v548 = vld [vmem:[%s542 + $0x14] sm:$0xf]
    %v549 = vld [vmem:[%s542 + $0x18] sm:$0xf]
    %v550 = vld [vmem:[%s542 + $0x1c] sm:$0xf]
    %v559 = vunpack.c.l.b16 %v543
    %v560 = vunpack.c.l.b16 %v544
    %v561 = vunpack.c.l.b16 %v545
    %v562 = vunpack.c.l.b16 %v546
    %v563 = vunpack.c.l.b16 %v547
    %v564 = vunpack.c.l.b16 %v548
    %v565 = vunpack.c.l.b16 %v549
    %v566 = vunpack.c.l.b16 %v550
    %v567 = vpack.c.b16 %v560, %v559
    %v568 = vpack.c.b16 %v562, %v561
    %v569 = vpack.c.b16 %v564, %v563
    %v570 = vpack.c.b16 %v566, %v565
    %v576 = vsel %vm65, %v534, 0
    %v579 = vsel %vm65, %v535, 0
    %v582 = vsel %vm65, %v536, 0
    %v585 = vsel %vm65, %v537, 0
    %v588 = vsel %vm65, %v538, 0
    %v591 = vsel %vm65, %v539, 0
    %v594 = vsel %vm65, %v540, 0
    %v597 = vsel %vm65, %v541, 0
    %599 = vmatprep.subr.bf16.mxu0 0
    %600 = vmatpush1.bf16.msra.mxu0 %v567
    %601 = vmatprep.subr.bf16.mxu0 0
    %602 = vmatpush1.bf16.msra.mxu0 %v568
    %603 = vmatprep.subr.bf16.mxu0 0
    %604 = vmatpush1.bf16.msra.mxu0 %v569
    %605 = vmatprep.subr.bf16.mxu0 0
    %606 = vmatpush1.bf16.msra.mxu0 %v570
    %607 = vmatprep.subr.bf16.mxu0 0
    %608 = vmatpush1.bf16.msra.mxu0 0
    %609 = vmatprep.subr.bf16.mxu0 0
    %610 = vmatpush1.bf16.msra.mxu0 0
    %611 = vmatprep.subr.bf16.mxu0 0
    %612 = vmatpush1.bf16.msra.mxu0 0
    %613 = vmatprep.subr.bf16.mxu0 0
    %614 = vmatpush1.bf16.msra.mxu0 0
    %615 = vmatprep.subr.bf16.mxu0 0
    %616 = vmatpush1.bf16.msra.mxu0 0
    %617 = vmatprep.subr.bf16.mxu0 0
    %618 = vmatpush1.bf16.msra.mxu0 0
    %619 = vmatprep.subr.bf16.mxu0 0
    %620 = vmatpush1.bf16.msra.mxu0 0
    %621 = vmatprep.subr.bf16.mxu0 0
    %622 = vmatpush1.bf16.msra.mxu0 0
    %623 = vmatprep.subr.bf16.mxu0 0
    %624 = vmatpush1.bf16.msra.mxu0 0
    %625 = vmatprep.subr.bf16.mxu0 0
    %626 = vmatpush1.bf16.msra.mxu0 0
    %627 = vmatprep.subr.bf16.mxu0 0
    %628 = vmatpush1.bf16.msra.mxu0 0
    %629 = vmatprep.subr.bf16.mxu0 0
    %630 = vmatpush1.bf16.msra.mxu0 0
    %631 = vmatprep.mubr.bf16.mxu0 0
    %632 = vmatmul.mubr.bf16.gmra.mrb[0].mxu0 %v576
    %v633 = vpop.f32.mrb[0].mxu0
    %v634 = vadd.f32 0.0, %v633
    %v635 = vpop.f32.mrb[0].mxu0
    %v636 = vpop.f32.mrb[0].mxu0
    %v637 = vadd.f32 0.0, %v636
    %v638 = vpop.f32.mrb[0].mxu0
    %639 = vmatprep.mubr.bf16.mxu0 0
    %640 = vmatmul.mubr.bf16.gmra.mrb[0].mxu0 %v579
    %v641 = vpop.f32.mrb[0].mxu0
    %v642 = vadd.f32 0.0, %v641
    %v643 = vpop.f32.mrb[0].mxu0
    %v644 = vpop.f32.mrb[0].mxu0
    %v645 = vadd.f32 0.0, %v644
    %v646 = vpop.f32.mrb[0].mxu0
    %647 = vmatprep.mubr.bf16.mxu0 0
    %648 = vmatmul.mubr.bf16.gmra.mrb[0].mxu0 %v582
    %v649 = vpop.f32.mrb[0].mxu0
    %v650 = vadd.f32 0.0, %v649
    %v651 = vpop.f32.mrb[0].mxu0
    %v652 = vpop.f32.mrb[0].mxu0
    %v653 = vadd.f32 0.0, %v652
    %v654 = vpop.f32.mrb[0].mxu0
    %655 = vmatprep.mubr.bf16.mxu0 0
    %656 = vmatmul.mubr.bf16.gmra.mrb[0].mxu0 %v585
    %v657 = vpop.f32.mrb[0].mxu0
    %v658 = vadd.f32 0.0, %v657
    %v659 = vpop.f32.mrb[0].mxu0
    %v660 = vpop.f32.mrb[0].mxu0
    %v661 = vadd.f32 0.0, %v660
    %v662 = vpop.f32.mrb[0].mxu0
    %663 = vmatprep.mubr.bf16.mxu0 0
    %664 = vmatmul.mubr.bf16.gmra.mrb[0].mxu0 %v588
    %v665 = vpop.f32.mrb[0].mxu0
    %v666 = vadd.f32 0.0, %v665
    %v667 = vpop.f32.mrb[0].mxu0
    %v668 = vpop.f32.mrb[0].mxu0
    %v669 = vadd.f32 0.0, %v668
    %v670 = vpop.f32.mrb[0].mxu0
    %671 = vmatprep.mubr.bf16.mxu0 0
    %672 = vmatmul.mubr.bf16.gmra.mrb[0].mxu0 %v591
    %v673 = vpop.f32.mrb[0].mxu0
    %v674 = vadd.f32 0.0, %v673
    %v675 = vpop.f32.mrb[0].mxu0
    %v676 = vpop.f32.mrb[0].mxu0
    %v677 = vadd.f32 0.0, %v676
    %v678 = vpop.f32.mrb[0].mxu0
    %679 = vmatprep.mubr.bf16.mxu0 0
    %680 = vmatmul.mubr.bf16.gmra.mrb[0].mxu0 %v594
    %v681 = vpop.f32.mrb[0].mxu0
    %v682 = vadd.f32 0.0, %v681
    %v683 = vpop.f32.mrb[0].mxu0
    %v684 = vpop.f32.mrb[0].mxu0
    %v685 = vadd.f32 0.0, %v684
    %v686 = vpop.f32.mrb[0].mxu0
    %687 = vmatprep.mubr.bf16.mxu0 0
    %688 = vmatmul.mubr.bf16.gmra.mrb[0].mxu0 %v597
    %v689 = vpop.f32.mrb[0].mxu0
    %v690 = vadd.f32 0.0, %v689
    %v691 = vpop.f32.mrb[0].mxu0
    %v692 = vpop.f32.mrb[0].mxu0
    %v693 = vadd.f32 0.0, %v692
    %v694 = vpop.f32.mrb[0].mxu0
    %695 = vdwg.mxu0
    %v696 = vadd.f32 %v472, %v634
    %v697 = vadd.f32 %v475, %v637
    %v698 = vadd.f32 %v480, %v642
    %v699 = vadd.f32 %v483, %v645
    %v700 = vadd.f32 %v488, %v650
    %v701 = vadd.f32 %v491, %v653
    %v702 = vadd.f32 %v496, %v658
    %v703 = vadd.f32 %v499, %v661
    %v704 = vadd.f32 %v504, %v666
    %v705 = vadd.f32 %v507, %v669
    %v706 = vadd.f32 %v512, %v674
    %v707 = vadd.f32 %v515, %v677
    %v708 = vadd.f32 %v520, %v682
    %v709 = vadd.f32 %v523, %v685
    %v710 = vadd.f32 %v528, %v690
    %v711 = vadd.f32 %v531, %v693
    %v712 = vld [vmem:[%s2] sm:$0x1]
    %v714 = vlaneseq
    %v715 = vshrl.u32 %v714, 7
    %v716 = vsub.s32 0, %v715
    %v717 = vrot.slane %v712, %v716
    %v719 = vmul.f32 %v696, %v717
    %v720 = vmul.f32 %v697, %v717
    %v721 = vmul.f32 %v698, %v717
    %v722 = vmul.f32 %v699, %v717
    %v723 = vmul.f32 %v700, %v717
    %v724 = vmul.f32 %v701, %v717
    %v725 = vmul.f32 %v702, %v717
    %v726 = vmul.f32 %v703, %v717
    %v727 = vmul.f32 %v704, %v717
    %v728 = vmul.f32 %v705, %v717
    %v729 = vmul.f32 %v706, %v717
    %v730 = vmul.f32 %v707, %v717
    %v731 = vmul.f32 %v708, %v717
    %v732 = vmul.f32 %v709, %v717
    %v733 = vmul.f32 %v710, %v717
    %v734 = vmul.f32 %v711, %v717
    %v735 = vld [vmem:[%s3] sm:$0x1]
    %v737 = vlaneseq
    %v738 = vshrl.u32 %v737, 7
    %v739 = vsub.s32 0, %v738
    %v740 = vrot.slane %v735, %v739
    %v742 = vadd.f32 %v719, %v740
    %v743 = vadd.f32 %v720, %v740
    %v744 = vadd.f32 %v721, %v740
    %v745 = vadd.f32 %v722, %v740
    %v746 = vadd.f32 %v723, %v740
    %v747 = vadd.f32 %v724, %v740
    %v748 = vadd.f32 %v725, %v740
    %v749 = vadd.f32 %v726, %v740
    %v750 = vadd.f32 %v727, %v740
    %v751 = vadd.f32 %v728, %v740
    %v752 = vadd.f32 %v729, %v740
    %v753 = vadd.f32 %v730, %v740
    %v754 = vadd.f32 %v731, %v740
    %v755 = vadd.f32 %v732, %v740
    %v756 = vadd.f32 %v733, %v740
    %v757 = vadd.f32 %v734, %v740
    %v758 = vmax.f32 %v742, 0.0
    %v759 = vmax.f32 %v743, 0.0
    %v760 = vmax.f32 %v744, 0.0
    %v761 = vmax.f32 %v745, 0.0
    %v762 = vmax.f32 %v746, 0.0
    %v763 = vmax.f32 %v747, 0.0
    %v764 = vmax.f32 %v748, 0.0
    %v765 = vmax.f32 %v749, 0.0
    %v766 = vmax.f32 %v750, 0.0
    %v767 = vmax.f32 %v751, 0.0
    %v768 = vmax.f32 %v752, 0.0
    %v769 = vmax.f32 %v753, 0.0
    %v770 = vmax.f32 %v754, 0.0
    %v771 = vmax.f32 %v755, 0.0
    %v772 = vmax.f32 %v756, 0.0
    %v773 = vmax.f32 %v757, 0.0
    %774 = vst [vmem:[#allocation4] sm:$0xff] 0
    %775 = vst [vmem:[#allocation4 + $0x48] sm:$0xff] 0
    %v776 = vpack.c.bf16 %v759, %v758
    %v777 = vpack.c.bf16 %v761, %v760
    %v778 = vpack.c.bf16 %v763, %v762
    %v779 = vpack.c.bf16 %v765, %v764
    %v780 = vpack.c.bf16 %v767, %v766
    %v781 = vpack.c.bf16 %v769, %v768
    %v782 = vpack.c.bf16 %v771, %v770
    %v783 = vpack.c.bf16 %v773, %v772
    %784 = vst [vmem:[#allocation4 + $0x8] sm:$0xff] %v776
    %785 = vst [vmem:[#allocation4 + $0x10] sm:$0xff] %v777
    %786 = vst [vmem:[#allocation4 + $0x18] sm:$0xff] %v778
    %787 = vst [vmem:[#allocation4 + $0x20] sm:$0xff] %v779
    %788 = vst [vmem:[#allocation4 + $0x28] sm:$0xff] %v780
    %789 = vst [vmem:[#allocation4 + $0x30] sm:$0xff] %v781
    %790 = vst [vmem:[#allocation4 + $0x38] sm:$0xff] %v782
    %791 = vst [vmem:[#allocation4 + $0x40] sm:$0xff] %v783
    %v792 = vld [vmem:[#allocation4] sm:$0xff]
    %v793 = vld [vmem:[#allocation4 + $0x8] sm:$0xff]
    %v794 = vld [vmem:[#allocation4 + $0x10] sm:$0xff]
    %v795 = vld [vmem:[#allocation4 + $0x18] sm:$0xff]
    %v796 = vld [vmem:[#allocation4 + $0x20] sm:$0xff]
    %v797 = vld [vmem:[#allocation4 + $0x28] sm:$0xff]
    %v798 = vld [vmem:[#allocation4 + $0x30] sm:$0xff]
    %v799 = vld [vmem:[#allocation4 + $0x38] sm:$0xff]
    %v800 = vld [vmem:[%s4] sm:$0xf]
    %v801 = vld [vmem:[%s4 + $0x4] sm:$0xf]
    %v802 = vld [vmem:[%s4 + $0x8] sm:$0xf]
    %v803 = vld [vmem:[%s4 + $0xc] sm:$0xf]
    %v804 = vld [vmem:[%s4 + $0x10] sm:$0xf]
    %v805 = vld [vmem:[%s4 + $0x14] sm:$0xf]
    %v806 = vld [vmem:[%s4 + $0x18] sm:$0xf]
    %v807 = vld [vmem:[%s4 + $0x1c] sm:$0xf]
    %v808 = vld [vmem:[%s4 + $0x20] sm:$0xf]
    %v809 = vld [vmem:[%s4 + $0x24] sm:$0xf]
    %v810 = vld [vmem:[%s4 + $0x28] sm:$0xf]
    %v811 = vld [vmem:[%s4 + $0x2c] sm:$0xf]
    %v812 = vld [vmem:[%s4 + $0x30] sm:$0xf]
    %v813 = vld [vmem:[%s4 + $0x34] sm:$0xf]
    %v814 = vld [vmem:[%s4 + $0x38] sm:$0xf]
    %v815 = vld [vmem:[%s4 + $0x3c] sm:$0xf]
    %v816 = vld [vmem:[#allocation4 + $0x40] sm:$0xff]
    %s817 = scalar_lea.vmem %s4, 64
    %v818 = vld [vmem:[%s817] sm:$0xf]
    %v819 = vld [vmem:[%s817 + $0x4] sm:$0xf]
    %v820 = vld [vmem:[%s817 + $0x8] sm:$0xf]
    %v821 = vld [vmem:[%s817 + $0xc] sm:$0xf]
    %v822 = vld [vmem:[%s817 + $0x10] sm:$0xf]
    %v823 = vld [vmem:[%s817 + $0x14] sm:$0xf]
    %v824 = vld [vmem:[%s817 + $0x18] sm:$0xf]
    %v825 = vld [vmem:[%s817 + $0x1c] sm:$0xf]
    %v826 = vld [vmem:[%s817 + $0x20] sm:$0xf]
    %v827 = vld [vmem:[%s817 + $0x24] sm:$0xf]
    %v828 = vld [vmem:[%s817 + $0x28] sm:$0xf]
    %v829 = vld [vmem:[%s817 + $0x2c] sm:$0xf]
    %v830 = vld [vmem:[%s817 + $0x30] sm:$0xf]
    %v831 = vld [vmem:[%s817 + $0x34] sm:$0xf]
    %v832 = vld [vmem:[%s817 + $0x38] sm:$0xf]
    %v833 = vld [vmem:[%s817 + $0x3c] sm:$0xf]
    %v850 = vunpack.c.l.b16 %v818
    %v851 = vunpack.c.l.b16 %v819
    %v852 = vunpack.c.l.b16 %v820
    %v853 = vunpack.c.l.b16 %v821
    %v854 = vunpack.c.l.b16 %v822
    %v855 = vunpack.c.l.b16 %v823
    %v856 = vunpack.c.l.b16 %v824
    %v857 = vunpack.c.l.b16 %v825
    %v858 = vunpack.c.l.b16 %v826
    %v859 = vunpack.c.l.b16 %v827
    %v860 = vunpack.c.l.b16 %v828
    %v861 = vunpack.c.l.b16 %v829
    %v862 = vunpack.c.l.b16 %v830
    %v863 = vunpack.c.l.b16 %v831
    %v864 = vunpack.c.l.b16 %v832
    %v865 = vunpack.c.l.b16 %v833
    %v866 = vpack.c.b16 %v851, %v850
    %v867 = vpack.c.b16 %v853, %v852
    %v868 = vpack.c.b16 %v855, %v854
    %v869 = vpack.c.b16 %v857, %v856
    %v870 = vpack.c.b16 %v859, %v858
    %v871 = vpack.c.b16 %v861, %v860
    %v872 = vpack.c.b16 %v863, %v862
    %v873 = vpack.c.b16 %v865, %v864
    %882 = vmatprep.subr.bf16.mxu0 0
    %883 = vmatpush1.bf16.msra.mxu0 %v866
    %884 = vmatprep.subr.bf16.mxu0 0
    %885 = vmatpush1.bf16.msra.mxu0 %v867
    %886 = vmatprep.subr.bf16.mxu0 0
    %887 = vmatpush1.bf16.msra.mxu0 %v868
    %888 = vmatprep.subr.bf16.mxu0 0
    %889 = vmatpush1.bf16.msra.mxu0 %v869
    %890 = vmatprep.subr.bf16.mxu0 0
    %891 = vmatpush1.bf16.msra.mxu0 %v870
    %892 = vmatprep.subr.bf16.mxu0 0
    %893 = vmatpush1.bf16.msra.mxu0 %v871
    %894 = vmatprep.subr.bf16.mxu0 0
    %895 = vmatpush1.bf16.msra.mxu0 %v872
    %896 = vmatprep.subr.bf16.mxu0 0
    %897 = vmatpush1.bf16.msra.mxu0 %v873
    %898 = vmatprep.subr.bf16.mxu0 0
    %899 = vmatpush1.bf16.msra.mxu0 0
    %900 = vmatprep.subr.bf16.mxu0 0
    %901 = vmatpush1.bf16.msra.mxu0 0
    %902 = vmatprep.subr.bf16.mxu0 0
    %903 = vmatpush1.bf16.msra.mxu0 0
    %904 = vmatprep.subr.bf16.mxu0 0
    %905 = vmatpush1.bf16.msra.mxu0 0
    %906 = vmatprep.subr.bf16.mxu0 0
    %907 = vmatpush1.bf16.msra.mxu0 0
    %908 = vmatprep.subr.bf16.mxu0 0
    %909 = vmatpush1.bf16.msra.mxu0 0
    %910 = vmatprep.subr.bf16.mxu0 0
    %911 = vmatpush1.bf16.msra.mxu0 0
    %912 = vmatprep.subr.bf16.mxu0 0
    %913 = vmatpush1.bf16.msra.mxu0 0
    %914 = vmatprep.mubr.bf16.mxu0 0
    %915 = vmatmul.mubr.bf16.gmra.mrb[0].mxu0 %v793
    %v916 = vpop.f32.mrb[0].mxu0
    %v917 = vadd.f32 0.0, %v916
    %v918 = vpop.f32.mrb[0].mxu0
    %v919 = vpop.f32.mrb[0].mxu0
    %v920 = vadd.f32 0.0, %v919
    %v921 = vpop.f32.mrb[0].mxu0
    %922 = vmatprep.mubr.bf16.mxu0 0
    %923 = vmatmul.mubr.bf16.gmra.mrb[0].mxu0 %v794
    %v924 = vpop.f32.mrb[0].mxu0
    %v925 = vadd.f32 0.0, %v924
    %v926 = vpop.f32.mrb[0].mxu0
    %v927 = vpop.f32.mrb[0].mxu0
    %v928 = vadd.f32 0.0, %v927
    %v929 = vpop.f32.mrb[0].mxu0
    %930 = vmatprep.mubr.bf16.mxu0 0
    %931 = vmatmul.mubr.bf16.gmra.mrb[0].mxu0 %v795
    %v932 = vpop.f32.mrb[0].mxu0
    %v933 = vadd.f32 0.0, %v932
    %v934 = vpop.f32.mrb[0].mxu0
    %v935 = vpop.f32.mrb[0].mxu0
    %v936 = vadd.f32 0.0, %v935
    %v937 = vpop.f32.mrb[0].mxu0
    %938 = vmatprep.mubr.bf16.mxu0 0
    %939 = vmatmul.mubr.bf16.gmra.mrb[0].mxu0 %v796
    %v940 = vpop.f32.mrb[0].mxu0
    %v941 = vadd.f32 0.0, %v940
    %v942 = vpop.f32.mrb[0].mxu0
    %v943 = vpop.f32.mrb[0].mxu0
    %v944 = vadd.f32 0.0, %v943
    %v945 = vpop.f32.mrb[0].mxu0
    %946 = vmatprep.mubr.bf16.mxu0 0
    %947 = vmatmul.mubr.bf16.gmra.mrb[0].mxu0 %v797
    %v948 = vpop.f32.mrb[0].mxu0
    %v949 = vadd.f32 0.0, %v948
    %v950 = vpop.f32.mrb[0].mxu0
    %v951 = vpop.f32.mrb[0].mxu0
    %v952 = vadd.f32 0.0, %v951
    %v953 = vpop.f32.mrb[0].mxu0
    %954 = vmatprep.mubr.bf16.mxu0 0
    %955 = vmatmul.mubr.bf16.gmra.mrb[0].mxu0 %v798
    %v956 = vpop.f32.mrb[0].mxu0
    %v957 = vadd.f32 0.0, %v956
    %v958 = vpop.f32.mrb[0].mxu0
    %v959 = vpop.f32.mrb[0].mxu0
    %v960 = vadd.f32 0.0, %v959
    %v961 = vpop.f32.mrb[0].mxu0
    %962 = vmatprep.mubr.bf16.mxu0 0
    %963 = vmatmul.mubr.bf16.gmra.mrb[0].mxu0 %v799
    %v964 = vpop.f32.mrb[0].mxu0
    %v965 = vadd.f32 0.0, %v964
    %v966 = vpop.f32.mrb[0].mxu0
    %v967 = vpop.f32.mrb[0].mxu0
    %v968 = vadd.f32 0.0, %v967
    %v969 = vpop.f32.mrb[0].mxu0
    %970 = vmatprep.mubr.bf16.mxu0 0
    %971 = vmatmul.mubr.bf16.gmra.mrb[0].mxu0 %v816
    %v972 = vpop.f32.mrb[0].mxu0
    %v973 = vadd.f32 0.0, %v972
    %v974 = vpop.f32.mrb[0].mxu0
    %v975 = vpop.f32.mrb[0].mxu0
    %v976 = vadd.f32 0.0, %v975
    %v977 = vpop.f32.mrb[0].mxu0
    %978 = vdwg.mxu0
    %v995 = vunpack.c.l.b16 %v800
    %v996 = vunpack.c.l.b16 %v801
    %v997 = vunpack.c.l.b16 %v802
    %v998 = vunpack.c.l.b16 %v803
    %v999 = vunpack.c.l.b16 %v804
    %v1000 = vunpack.c.l.b16 %v805
    %v1001 = vunpack.c.l.b16 %v806
    %v1002 = vunpack.c.l.b16 %v807
    %v1003 = vunpack.c.l.b16 %v808
    %v1004 = vunpack.c.l.b16 %v809
    %v1005 = vunpack.c.l.b16 %v810
    %v1006 = vunpack.c.l.b16 %v811
    %v1007 = vunpack.c.l.b16 %v812
    %v1008 = vunpack.c.l.b16 %v813
    %v1009 = vunpack.c.l.b16 %v814
    %v1010 = vunpack.c.l.b16 %v815
    %v1011 = vpack.c.b16 %v996, %v995
    %v1012 = vpack.c.b16 %v998, %v997
    %v1013 = vpack.c.b16 %v1000, %v999
    %v1014 = vpack.c.b16 %v1002, %v1001
    %v1015 = vpack.c.b16 %v1004, %v1003
    %v1016 = vpack.c.b16 %v1006, %v1005
    %v1017 = vpack.c.b16 %v1008, %v1007
    %v1018 = vpack.c.b16 %v1010, %v1009
    %1027 = vmatprep.subr.bf16.mxu0 0
    %1028 = vmatpush1.bf16.msra.mxu0 %v1011
    %1029 = vmatprep.subr.bf16.mxu0 0
    %1030 = vmatpush1.bf16.msra.mxu0 %v1012
    %1031 = vmatprep.subr.bf16.mxu0 0
    %1032 = vmatpush1.bf16.msra.mxu0 %v1013
    %1033 = vmatprep.subr.bf16.mxu0 0
    %1034 = vmatpush1.bf16.msra.mxu0 %v1014
    %1035 = vmatprep.subr.bf16.mxu0 0
    %1036 = vmatpush1.bf16.msra.mxu0 %v1015
    %1037 = vmatprep.subr.bf16.mxu0 0
    %1038 = vmatpush1.bf16.msra.mxu0 %v1016
    %1039 = vmatprep.subr.bf16.mxu0 0
    %1040 = vmatpush1.bf16.msra.mxu0 %v1017
    %1041 = vmatprep.subr.bf16.mxu0 0
    %1042 = vmatpush1.bf16.msra.mxu0 %v1018
    %1043 = vmatprep.subr.bf16.mxu0 0
    %1044 = vmatpush1.bf16.msra.mxu0 0
    %1045 = vmatprep.subr.bf16.mxu0 0
    %1046 = vmatpush1.bf16.msra.mxu0 0
    %1047 = vmatprep.subr.bf16.mxu0 0
    %1048 = vmatpush1.bf16.msra.mxu0 0
    %1049 = vmatprep.subr.bf16.mxu0 0
    %1050 = vmatpush1.bf16.msra.mxu0 0
    %1051 = vmatprep.subr.bf16.mxu0 0
    %1052 = vmatpush1.bf16.msra.mxu0 0
    %1053 = vmatprep.subr.bf16.mxu0 0
    %1054 = vmatpush1.bf16.msra.mxu0 0
    %1055 = vmatprep.subr.bf16.mxu0 0
    %1056 = vmatpush1.bf16.msra.mxu0 0
    %1057 = vmatprep.subr.bf16.mxu0 0
    %1058 = vmatpush1.bf16.msra.mxu0 0
    %1059 = vmatprep.mubr.bf16.mxu0 0
    %1060 = vmatmul.mubr.bf16.gmra.mrb[0].mxu0 %v792
    %v1061 = vpop.f32.mrb[0].mxu0
    %v1062 = vadd.f32 %v917, %v1061
    %v1063 = vpop.f32.mrb[0].mxu0
    %v1064 = vpop.f32.mrb[0].mxu0
    %v1065 = vadd.f32 %v920, %v1064
    %v1066 = vpop.f32.mrb[0].mxu0
    %1067 = vmatprep.mubr.bf16.mxu0 0
    %1068 = vmatmul.mubr.bf16.gmra.mrb[0].mxu0 %v793
    %v1069 = vpop.f32.mrb[0].mxu0
    %v1070 = vadd.f32 %v925, %v1069
    %v1071 = vpop.f32.mrb[0].mxu0
    %v1072 = vpop.f32.mrb[0].mxu0
    %v1073 = vadd.f32 %v928, %v1072
    %v1074 = vpop.f32.mrb[0].mxu0
    %1075 = vmatprep.mubr.bf16.mxu0 0
    %1076 = vmatmul.mubr.bf16.gmra.mrb[0].mxu0 %v794
    %v1077 = vpop.f32.mrb[0].mxu0
    %v1078 = vadd.f32 %v933, %v1077
    %v1079 = vpop.f32.mrb[0].mxu0
    %v1080 = vpop.f32.mrb[0].mxu0
    %v1081 = vadd.f32 %v936, %v1080
    %v1082 = vpop.f32.mrb[0].mxu0
    %1083 = vmatprep.mubr.bf16.mxu0 0
    %1084 = vmatmul.mubr.bf16.gmra.mrb[0].mxu0 %v795
    %v1085 = vpop.f32.mrb[0].mxu0
    %v1086 = vadd.f32 %v941, %v1085
    %v1087 = vpop.f32.mrb[0].mxu0
    %v1088 = vpop.f32.mrb[0].mxu0
    %v1089 = vadd.f32 %v944, %v1088
    %v1090 = vpop.f32.mrb[0].mxu0
    %1091 = vmatprep.mubr.bf16.mxu0 0
    %1092 = vmatmul.mubr.bf16.gmra.mrb[0].mxu0 %v796
    %v1093 = vpop.f32.mrb[0].mxu0
    %v1094 = vadd.f32 %v949, %v1093
    %v1095 = vpop.f32.mrb[0].mxu0
    %v1096 = vpop.f32.mrb[0].mxu0
    %v1097 = vadd.f32 %v952, %v1096
    %v1098 = vpop.f32.mrb[0].mxu0
    %1099 = vmatprep.mubr.bf16.mxu0 0
    %1100 = vmatmul.mubr.bf16.gmra.mrb[0].mxu0 %v797
    %v1101 = vpop.f32.mrb[0].mxu0
    %v1102 = vadd.f32 %v957, %v1101
    %v1103 = vpop.f32.mrb[0].mxu0
    %v1104 = vpop.f32.mrb[0].mxu0
    %v1105 = vadd.f32 %v960, %v1104
    %v1106 = vpop.f32.mrb[0].mxu0
    %1107 = vmatprep.mubr.bf16.mxu0 0
    %1108 = vmatmul.mubr.bf16.gmra.mrb[0].mxu0 %v798
    %v1109 = vpop.f32.mrb[0].mxu0
    %v1110 = vadd.f32 %v965, %v1109
    %v1111 = vpop.f32.mrb[0].mxu0
    %v1112 = vpop.f32.mrb[0].mxu0
    %v1113 = vadd.f32 %v968, %v1112
    %v1114 = vpop.f32.mrb[0].mxu0
    %1115 = vmatprep.mubr.bf16.mxu0 0
    %1116 = vmatmul.mubr.bf16.gmra.mrb[0].mxu0 %v799
    %v1117 = vpop.f32.mrb[0].mxu0
    %v1118 = vadd.f32 %v973, %v1117
    %v1119 = vpop.f32.mrb[0].mxu0
    %v1120 = vpop.f32.mrb[0].mxu0
    %v1121 = vadd.f32 %v976, %v1120
    %v1122 = vpop.f32.mrb[0].mxu0
    %1123 = vdwg.mxu0
    %v1124 = vld [vmem:[#allocation4 + $0x10] sm:$0xff]
    %v1125 = vld [vmem:[#allocation4 + $0x18] sm:$0xff]
    %v1126 = vld [vmem:[#allocation4 + $0x20] sm:$0xff]
    %v1127 = vld [vmem:[#allocation4 + $0x28] sm:$0xff]
    %v1128 = vld [vmem:[#allocation4 + $0x30] sm:$0xff]
    %v1129 = vld [vmem:[#allocation4 + $0x38] sm:$0xff]
    %v1130 = vld [vmem:[#allocation4 + $0x40] sm:$0xff]
    %v1131 = vld [vmem:[#allocation4 + $0x48] sm:$0xff]
    %s1132 = scalar_lea.vmem %s4, 128
    %v1133 = vld [vmem:[%s1132] sm:$0xf]
    %v1134 = vld [vmem:[%s1132 + $0x4] sm:$0xf]
    %v1135 = vld [vmem:[%s1132 + $0x8] sm:$0xf]
    %v1136 = vld [vmem:[%s1132 + $0xc] sm:$0xf]
    %v1137 = vld [vmem:[%s1132 + $0x10] sm:$0xf]
    %v1138 = vld [vmem:[%s1132 + $0x14] sm:$0xf]
    %v1139 = vld [vmem:[%s1132 + $0x18] sm:$0xf]
    %v1140 = vld [vmem:[%s1132 + $0x1c] sm:$0xf]
    %v1141 = vld [vmem:[%s1132 + $0x20] sm:$0xf]
    %v1142 = vld [vmem:[%s1132 + $0x24] sm:$0xf]
    %v1143 = vld [vmem:[%s1132 + $0x28] sm:$0xf]
    %v1144 = vld [vmem:[%s1132 + $0x2c] sm:$0xf]
    %v1145 = vld [vmem:[%s1132 + $0x30] sm:$0xf]
    %v1146 = vld [vmem:[%s1132 + $0x34] sm:$0xf]
    %v1147 = vld [vmem:[%s1132 + $0x38] sm:$0xf]
    %v1148 = vld [vmem:[%s1132 + $0x3c] sm:$0xf]
    %v1165 = vunpack.c.l.b16 %v1133
    %v1166 = vunpack.c.l.b16 %v1134
    %v1167 = vunpack.c.l.b16 %v1135
    %v1168 = vunpack.c.l.b16 %v1136
    %v1169 = vunpack.c.l.b16 %v1137
    %v1170 = vunpack.c.l.b16 %v1138
    %v1171 = vunpack.c.l.b16 %v1139
    %v1172 = vunpack.c.l.b16 %v1140
    %v1173 = vunpack.c.l.b16 %v1141
    %v1174 = vunpack.c.l.b16 %v1142
    %v1175 = vunpack.c.l.b16 %v1143
    %v1176 = vunpack.c.l.b16 %v1144
    %v1177 = vunpack.c.l.b16 %v1145
    %v1178 = vunpack.c.l.b16 %v1146
    %v1179 = vunpack.c.l.b16 %v1147
    %v1180 = vunpack.c.l.b16 %v1148
    %v1181 = vpack.c.b16 %v1166, %v1165
    %v1182 = vpack.c.b16 %v1168, %v1167
    %v1183 = vpack.c.b16 %v1170, %v1169
    %v1184 = vpack.c.b16 %v1172, %v1171
    %v1185 = vpack.c.b16 %v1174, %v1173
    %v1186 = vpack.c.b16 %v1176, %v1175
    %v1187 = vpack.c.b16 %v1178, %v1177
    %v1188 = vpack.c.b16 %v1180, %v1179
    %1197 = vmatprep.subr.bf16.mxu0 0
    %1198 = vmatpush1.bf16.msra.mxu0 %v1181
    %1199 = vmatprep.subr.bf16.mxu0 0
    %1200 = vmatpush1.bf16.msra.mxu0 %v1182
    %1201 = vmatprep.subr.bf16.mxu0 0
    %1202 = vmatpush1.bf16.msra.mxu0 %v1183
    %1203 = vmatprep.subr.bf16.mxu0 0
    %1204 = vmatpush1.bf16.msra.mxu0 %v1184
    %1205 = vmatprep.subr.bf16.mxu0 0
    %1206 = vmatpush1.bf16.msra.mxu0 %v1185
    %1207 = vmatprep.subr.bf16.mxu0 0
    %1208 = vmatpush1.bf16.msra.mxu0 %v1186
    %1209 = vmatprep.subr.bf16.mxu0 0
    %1210 = vmatpush1.bf16.msra.mxu0 %v1187
    %1211 = vmatprep.subr.bf16.mxu0 0
    %1212 = vmatpush1.bf16.msra.mxu0 %v1188
    %1213 = vmatprep.subr.bf16.mxu0 0
    %1214 = vmatpush1.bf16.msra.mxu0 0
    %1215 = vmatprep.subr.bf16.mxu0 0
    %1216 = vmatpush1.bf16.msra.mxu0 0
    %1217 = vmatprep.subr.bf16.mxu0 0
    %1218 = vmatpush1.bf16.msra.mxu0 0
    %1219 = vmatprep.subr.bf16.mxu0 0
    %1220 = vmatpush1.bf16.msra.mxu0 0
    %1221 = vmatprep.subr.bf16.mxu0 0
    %1222 = vmatpush1.bf16.msra.mxu0 0
    %1223 = vmatprep.subr.bf16.mxu0 0
    %1224 = vmatpush1.bf16.msra.mxu0 0
    %1225 = vmatprep.subr.bf16.mxu0 0
    %1226 = vmatpush1.bf16.msra.mxu0 0
    %1227 = vmatprep.subr.bf16.mxu0 0
    %1228 = vmatpush1.bf16.msra.mxu0 0
    %1229 = vmatprep.mubr.bf16.mxu0 0
    %1230 = vmatmul.mubr.bf16.gmra.mrb[0].mxu0 %v1124
    %v1231 = vpop.f32.mrb[0].mxu0
    %v1232 = vadd.f32 0.0, %v1231
    %v1233 = vpop.f32.mrb[0].mxu0
    %v1234 = vpop.f32.mrb[0].mxu0
    %v1235 = vadd.f32 0.0, %v1234
    %v1236 = vpop.f32.mrb[0].mxu0
    %1237 = vmatprep.mubr.bf16.mxu0 0
    %1238 = vmatmul.mubr.bf16.gmra.mrb[0].mxu0 %v1125
    %v1239 = vpop.f32.mrb[0].mxu0
    %v1240 = vadd.f32 0.0, %v1239
    %v1241 = vpop.f32.mrb[0].mxu0
    %v1242 = vpop.f32.mrb[0].mxu0
    %v1243 = vadd.f32 0.0, %v1242
    %v1244 = vpop.f32.mrb[0].mxu0
    %1245 = vmatprep.mubr.bf16.mxu0 0
    %1246 = vmatmul.mubr.bf16.gmra.mrb[0].mxu0 %v1126
    %v1247 = vpop.f32.mrb[0].mxu0
    %v1248 = vadd.f32 0.0, %v1247
    %v1249 = vpop.f32.mrb[0].mxu0
    %v1250 = vpop.f32.mrb[0].mxu0
    %v1251 = vadd.f32 0.0, %v1250
    %v1252 = vpop.f32.mrb[0].mxu0
    %1253 = vmatprep.mubr.bf16.mxu0 0
    %1254 = vmatmul.mubr.bf16.gmra.mrb[0].mxu0 %v1127
    %v1255 = vpop.f32.mrb[0].mxu0
    %v1256 = vadd.f32 0.0, %v1255
    %v1257 = vpop.f32.mrb[0].mxu0
    %v1258 = vpop.f32.mrb[0].mxu0
    %v1259 = vadd.f32 0.0, %v1258
    %v1260 = vpop.f32.mrb[0].mxu0
    %1261 = vmatprep.mubr.bf16.mxu0 0
    %1262 = vmatmul.mubr.bf16.gmra.mrb[0].mxu0 %v1128
    %v1263 = vpop.f32.mrb[0].mxu0
    %v1264 = vadd.f32 0.0, %v1263
    %v1265 = vpop.f32.mrb[0].mxu0
    %v1266 = vpop.f32.mrb[0].mxu0
    %v1267 = vadd.f32 0.0, %v1266
    %v1268 = vpop.f32.mrb[0].mxu0
    %1269 = vmatprep.mubr.bf16.mxu0 0
    %1270 = vmatmul.mubr.bf16.gmra.mrb[0].mxu0 %v1129
    %v1271 = vpop.f32.mrb[0].mxu0
    %v1272 = vadd.f32 0.0, %v1271
    %v1273 = vpop.f32.mrb[0].mxu0
    %v1274 = vpop.f32.mrb[0].mxu0
    %v1275 = vadd.f32 0.0, %v1274
    %v1276 = vpop.f32.mrb[0].mxu0
    %1277 = vmatprep.mubr.bf16.mxu0 0
    %1278 = vmatmul.mubr.bf16.gmra.mrb[0].mxu0 %v1130
    %v1279 = vpop.f32.mrb[0].mxu0
    %v1280 = vadd.f32 0.0, %v1279
    %v1281 = vpop.f32.mrb[0].mxu0
    %v1282 = vpop.f32.mrb[0].mxu0
    %v1283 = vadd.f32 0.0, %v1282
    %v1284 = vpop.f32.mrb[0].mxu0
    %1285 = vmatprep.mubr.bf16.mxu0 0
    %1286 = vmatmul.mubr.bf16.gmra.mrb[0].mxu0 %v1131
    %v1287 = vpop.f32.mrb[0].mxu0
    %v1288 = vadd.f32 0.0, %v1287
    %v1289 = vpop.f32.mrb[0].mxu0
    %v1290 = vpop.f32.mrb[0].mxu0
    %v1291 = vadd.f32 0.0, %v1290
    %v1292 = vpop.f32.mrb[0].mxu0
    %1293 = vdwg.mxu0
    %v1294 = vadd.f32 %v1062, %v1232
    %v1295 = vadd.f32 %v1065, %v1235
    %v1296 = vadd.f32 %v1070, %v1240
    %v1297 = vadd.f32 %v1073, %v1243
    %v1298 = vadd.f32 %v1078, %v1248
    %v1299 = vadd.f32 %v1081, %v1251
    %v1300 = vadd.f32 %v1086, %v1256
    %v1301 = vadd.f32 %v1089, %v1259
    %v1302 = vadd.f32 %v1094, %v1264
    %v1303 = vadd.f32 %v1097, %v1267
    %v1304 = vadd.f32 %v1102, %v1272
    %v1305 = vadd.f32 %v1105, %v1275
    %v1306 = vadd.f32 %v1110, %v1280
    %v1307 = vadd.f32 %v1113, %v1283
    %v1308 = vadd.f32 %v1118, %v1288
    %v1309 = vadd.f32 %v1121, %v1291
    %v1310 = vld [vmem:[%s5] sm:$0x1]
    %v1312 = vlaneseq
    %v1313 = vshrl.u32 %v1312, 7
    %v1314 = vsub.s32 0, %v1313
    %v1315 = vrot.slane %v1310, %v1314
    %v1317 = vmul.f32 %v1294, %v1315
    %v1318 = vmul.f32 %v1295, %v1315
    %v1319 = vmul.f32 %v1296, %v1315
    %v1320 = vmul.f32 %v1297, %v1315
    %v1321 = vmul.f32 %v1298, %v1315
    %v1322 = vmul.f32 %v1299, %v1315
    %v1323 = vmul.f32 %v1300, %v1315
    %v1324 = vmul.f32 %v1301, %v1315
    %v1325 = vmul.f32 %v1302, %v1315
    %v1326 = vmul.f32 %v1303, %v1315
    %v1327 = vmul.f32 %v1304, %v1315
    %v1328 = vmul.f32 %v1305, %v1315
    %v1329 = vmul.f32 %v1306, %v1315
    %v1330 = vmul.f32 %v1307, %v1315
    %v1331 = vmul.f32 %v1308, %v1315
    %v1332 = vmul.f32 %v1309, %v1315
    %v1333 = vld [vmem:[%s6] sm:$0x1]
    %v1335 = vlaneseq
    %v1336 = vshrl.u32 %v1335, 7
    %v1337 = vsub.s32 0, %v1336
    %v1338 = vrot.slane %v1333, %v1337
    %v1340 = vadd.f32 %v1317, %v1338
    %v1341 = vadd.f32 %v1318, %v1338
    %v1342 = vadd.f32 %v1319, %v1338
    %v1343 = vadd.f32 %v1320, %v1338
    %v1344 = vadd.f32 %v1321, %v1338
    %v1345 = vadd.f32 %v1322, %v1338
    %v1346 = vadd.f32 %v1323, %v1338
    %v1347 = vadd.f32 %v1324, %v1338
    %v1348 = vadd.f32 %v1325, %v1338
    %v1349 = vadd.f32 %v1326, %v1338
    %v1350 = vadd.f32 %v1327, %v1338
    %v1351 = vadd.f32 %v1328, %v1338
    %v1352 = vadd.f32 %v1329, %v1338
    %v1353 = vadd.f32 %v1330, %v1338
    %v1354 = vadd.f32 %v1331, %v1338
    %v1355 = vadd.f32 %v1332, %v1338
    %v1356 = vld [vmem:[#allocation3] sm:$0xff]
    %v1357 = vld [vmem:[#allocation3 + $0x8] sm:$0xff]
    %v1358 = vld [vmem:[#allocation3 + $0x10] sm:$0xff]
    %v1359 = vld [vmem:[#allocation3 + $0x18] sm:$0xff]
    %v1360 = vld [vmem:[#allocation3 + $0x20] sm:$0xff]
    %v1361 = vld [vmem:[#allocation3 + $0x28] sm:$0xff]
    %v1362 = vld [vmem:[#allocation3 + $0x30] sm:$0xff]
    %v1363 = vld [vmem:[#allocation3 + $0x38] sm:$0xff]
    %v1364 = vld [vmem:[#allocation8] sm:$0xf]
    %v1365 = vld [vmem:[#allocation8 + $0x4] sm:$0xf]
    %v1366 = vld [vmem:[#allocation8 + $0x8] sm:$0xf]
    %v1367 = vld [vmem:[#allocation8 + $0xc] sm:$0xf]
    %v1368 = vld [vmem:[#allocation8 + $0x10] sm:$0xf]
    %v1369 = vld [vmem:[#allocation8 + $0x14] sm:$0xf]
    %v1370 = vld [vmem:[#allocation8 + $0x18] sm:$0xf]
    %v1371 = vld [vmem:[#allocation8 + $0x1c] sm:$0xf]
    %v1380 = vunpack.c.l.b16 %v1364
    %v1381 = vunpack.c.l.b16 %v1365
    %v1382 = vunpack.c.l.b16 %v1366
    %v1383 = vunpack.c.l.b16 %v1367
    %v1384 = vunpack.c.l.b16 %v1368
    %v1385 = vunpack.c.l.b16 %v1369
    %v1386 = vunpack.c.l.b16 %v1370
    %v1387 = vunpack.c.l.b16 %v1371
    %v1388 = vpack.c.b16 %v1381, %v1380
    %v1389 = vpack.c.b16 %v1383, %v1382
    %v1390 = vpack.c.b16 %v1385, %v1384
    %v1391 = vpack.c.b16 %v1387, %v1386
    %v1397 = vsel %vm65, %v1356, 0
    %v1400 = vsel %vm65, %v1357, 0
    %v1403 = vsel %vm65, %v1358, 0
    %v1406 = vsel %vm65, %v1359, 0
    %v1409 = vsel %vm65, %v1360, 0
    %v1412 = vsel %vm65, %v1361, 0
    %v1415 = vsel %vm65, %v1362, 0
    %v1418 = vsel %vm65, %v1363, 0
    %1420 = vmatprep.subr.bf16.mxu0 0
    %1421 = vmatpush1.bf16.msra.mxu0 %v1388
    %1422 = vmatprep.subr.bf16.mxu0 0
    %1423 = vmatpush1.bf16.msra.mxu0 %v1389
    %1424 = vmatprep.subr.bf16.mxu0 0
    %1425 = vmatpush1.bf16.msra.mxu0 %v1390
    %1426 = vmatprep.subr.bf16.mxu0 0
    %1427 = vmatpush1.bf16.msra.mxu0 %v1391
    %1428 = vmatprep.subr.bf16.mxu0 0
    %1429 = vmatpush1.bf16.msra.mxu0 0
    %1430 = vmatprep.subr.bf16.mxu0 0
    %1431 = vmatpush1.bf16.msra.mxu0 0
    %1432 = vmatprep.subr.bf16.mxu0 0
    %1433 = vmatpush1.bf16.msra.mxu0 0
    %1434 = vmatprep.subr.bf16.mxu0 0
    %1435 = vmatpush1.bf16.msra.mxu0 0
    %1436 = vmatprep.subr.bf16.mxu0 0
    %1437 = vmatpush1.bf16.msra.mxu0 0
    %1438 = vmatprep.subr.bf16.mxu0 0
    %1439 = vmatpush1.bf16.msra.mxu0 0
    %1440 = vmatprep.subr.bf16.mxu0 0
    %1441 = vmatpush1.bf16.msra.mxu0 0
    %1442 = vmatprep.subr.bf16.mxu0 0
    %1443 = vmatpush1.bf16.msra.mxu0 0
    %1444 = vmatprep.subr.bf16.mxu0 0
    %1445 = vmatpush1.bf16.msra.mxu0 0
    %1446 = vmatprep.subr.bf16.mxu0 0
    %1447 = vmatpush1.bf16.msra.mxu0 0
    %1448 = vmatprep.subr.bf16.mxu0 0
    %1449 = vmatpush1.bf16.msra.mxu0 0
    %1450 = vmatprep.subr.bf16.mxu0 0
    %1451 = vmatpush1.bf16.msra.mxu0 0
    %1452 = vmatprep.mubr.bf16.mxu0 0
    %1453 = vmatmul.mubr.bf16.gmra.mrb[0].mxu0 %v1397
    %v1454 = vpop.f32.mrb[0].mxu0
    %v1455 = vadd.f32 0.0, %v1454
    %v1456 = vpop.f32.mrb[0].mxu0
    %v1457 = vpop.f32.mrb[0].mxu0
    %v1458 = vadd.f32 0.0, %v1457
    %v1459 = vpop.f32.mrb[0].mxu0
    %1460 = vmatprep.mubr.bf16.mxu0 0
    %1461 = vmatmul.mubr.bf16.gmra.mrb[0].mxu0 %v1400
    %v1462 = vpop.f32.mrb[0].mxu0
    %v1463 = vadd.f32 0.0, %v1462
    %v1464 = vpop.f32.mrb[0].mxu0
    %v1465 = vpop.f32.mrb[0].mxu0
    %v1466 = vadd.f32 0.0, %v1465
    %v1467 = vpop.f32.mrb[0].mxu0
    %1468 = vmatprep.mubr.bf16.mxu0 0
    %1469 = vmatmul.mubr.bf16.gmra.mrb[0].mxu0 %v1403
    %v1470 = vpop.f32.mrb[0].mxu0
    %v1471 = vadd.f32 0.0, %v1470
    %v1472 = vpop.f32.mrb[0].mxu0
    %v1473 = vpop.f32.mrb[0].mxu0
    %v1474 = vadd.f32 0.0, %v1473
    %v1475 = vpop.f32.mrb[0].mxu0
    %1476 = vmatprep.mubr.bf16.mxu0 0
    %1477 = vmatmul.mubr.bf16.gmra.mrb[0].mxu0 %v1406
    %v1478 = vpop.f32.mrb[0].mxu0
    %v1479 = vadd.f32 0.0, %v1478
    %v1480 = vpop.f32.mrb[0].mxu0
    %v1481 = vpop.f32.mrb[0].mxu0
    %v1482 = vadd.f32 0.0, %v1481
    %v1483 = vpop.f32.mrb[0].mxu0
    %1484 = vmatprep.mubr.bf16.mxu0 0
    %1485 = vmatmul.mubr.bf16.gmra.mrb[0].mxu0 %v1409
    %v1486 = vpop.f32.mrb[0].mxu0
    %v1487 = vadd.f32 0.0, %v1486
    %v1488 = vpop.f32.mrb[0].mxu0
    %v1489 = vpop.f32.mrb[0].mxu0
    %v1490 = vadd.f32 0.0, %v1489
    %v1491 = vpop.f32.mrb[0].mxu0
    %1492 = vmatprep.mubr.bf16.mxu0 0
    %1493 = vmatmul.mubr.bf16.gmra.mrb[0].mxu0 %v1412
    %v1494 = vpop.f32.mrb[0].mxu0
    %v1495 = vadd.f32 0.0, %v1494
    %v1496 = vpop.f32.mrb[0].mxu0
    %v1497 = vpop.f32.mrb[0].mxu0
    %v1498 = vadd.f32 0.0, %v1497
    %v1499 = vpop.f32.mrb[0].mxu0
    %1500 = vmatprep.mubr.bf16.mxu0 0
    %1501 = vmatmul.mubr.bf16.gmra.mrb[0].mxu0 %v1415
    %v1502 = vpop.f32.mrb[0].mxu0
    %v1503 = vadd.f32 0.0, %v1502
    %v1504 = vpop.f32.mrb[0].mxu0
    %v1505 = vpop.f32.mrb[0].mxu0
    %v1506 = vadd.f32 0.0, %v1505
    %v1507 = vpop.f32.mrb[0].mxu0
    %1508 = vmatprep.mubr.bf16.mxu0 0
    %1509 = vmatmul.mubr.bf16.gmra.mrb[0].mxu0 %v1418
    %v1510 = vpop.f32.mrb[0].mxu0
    %v1511 = vadd.f32 0.0, %v1510
    %v1512 = vpop.f32.mrb[0].mxu0
    %v1513 = vpop.f32.mrb[0].mxu0
    %v1514 = vadd.f32 0.0, %v1513
    %v1515 = vpop.f32.mrb[0].mxu0
    %1516 = vdwg.mxu0
    %v1517 = vld [vmem:[%s8] sm:$0x1]
    %v1519 = vlaneseq
    %v1520 = vshrl.u32 %v1519, 7
    %v1521 = vsub.s32 0, %v1520
    %v1522 = vrot.slane %v1517, %v1521
    %v1524 = vmul.f32 %v1455, %v1522
    %v1525 = vmul.f32 %v1458, %v1522
    %v1526 = vmul.f32 %v1463, %v1522
    %v1527 = vmul.f32 %v1466, %v1522
    %v1528 = vmul.f32 %v1471, %v1522
    %v1529 = vmul.f32 %v1474, %v1522
    %v1530 = vmul.f32 %v1479, %v1522
    %v1531 = vmul.f32 %v1482, %v1522
    %v1532 = vmul.f32 %v1487, %v1522
    %v1533 = vmul.f32 %v1490, %v1522
    %v1534 = vmul.f32 %v1495, %v1522
    %v1535 = vmul.f32 %v1498, %v1522
    %v1536 = vmul.f32 %v1503, %v1522
    %v1537 = vmul.f32 %v1506, %v1522
    %v1538 = vmul.f32 %v1511, %v1522
    %v1539 = vmul.f32 %v1514, %v1522
    %v1540 = vld [vmem:[%s9] sm:$0x1]
    %v1542 = vlaneseq
    %v1543 = vshrl.u32 %v1542, 7
    %v1544 = vsub.s32 0, %v1543
    %v1545 = vrot.slane %v1540, %v1544
    %v1547 = vadd.f32 %v1524, %v1545
    %v1548 = vadd.f32 %v1525, %v1545
    %v1549 = vadd.f32 %v1526, %v1545
    %v1550 = vadd.f32 %v1527, %v1545
    %v1551 = vadd.f32 %v1528, %v1545
    %v1552 = vadd.f32 %v1529, %v1545
    %v1553 = vadd.f32 %v1530, %v1545
    %v1554 = vadd.f32 %v1531, %v1545
    %v1555 = vadd.f32 %v1532, %v1545
    %v1556 = vadd.f32 %v1533, %v1545
    %v1557 = vadd.f32 %v1534, %v1545
    %v1558 = vadd.f32 %v1535, %v1545
    %v1559 = vadd.f32 %v1536, %v1545
    %v1560 = vadd.f32 %v1537, %v1545
    %v1561 = vadd.f32 %v1538, %v1545
    %v1562 = vadd.f32 %v1539, %v1545
    %v1563 = vadd.f32 %v1340, %v1547
    %v1564 = vadd.f32 %v1341, %v1548
    %v1565 = vadd.f32 %v1342, %v1549
    %v1566 = vadd.f32 %v1343, %v1550
    %v1567 = vadd.f32 %v1344, %v1551
    %v1568 = vadd.f32 %v1345, %v1552
    %v1569 = vadd.f32 %v1346, %v1553
    %v1570 = vadd.f32 %v1347, %v1554
    %v1571 = vadd.f32 %v1348, %v1555
    %v1572 = vadd.f32 %v1349, %v1556
    %v1573 = vadd.f32 %v1350, %v1557
    %v1574 = vadd.f32 %v1351, %v1558
    %v1575 = vadd.f32 %v1352, %v1559
    %v1576 = vadd.f32 %v1353, %v1560
    %v1577 = vadd.f32 %v1354, %v1561
    %v1578 = vadd.f32 %v1355, %v1562
    %v1579 = vmax.f32 %v1563, 0.0
    %v1580 = vmax.f32 %v1564, 0.0
    %v1581 = vmax.f32 %v1565, 0.0
    %v1582 = vmax.f32 %v1566, 0.0
    %v1583 = vmax.f32 %v1567, 0.0
    %v1584 = vmax.f32 %v1568, 0.0
    %v1585 = vmax.f32 %v1569, 0.0
    %v1586 = vmax.f32 %v1570, 0.0
    %v1587 = vmax.f32 %v1571, 0.0
    %v1588 = vmax.f32 %v1572, 0.0
    %v1589 = vmax.f32 %v1573, 0.0
    %v1590 = vmax.f32 %v1574, 0.0
    %v1591 = vmax.f32 %v1575, 0.0
    %v1592 = vmax.f32 %v1576, 0.0
    %v1593 = vmax.f32 %v1577, 0.0
    %v1594 = vmax.f32 %v1578, 0.0
    %1595 = vst [vmem:[#allocation10] sm:$0xff] %v1579
    %1596 = vst [vmem:[#allocation10 + $0x8] sm:$0xff] %v1580
    %1597 = vst [vmem:[#allocation10 + $0x10] sm:$0xff] %v1581
    %1598 = vst [vmem:[#allocation10 + $0x18] sm:$0xff] %v1582
    %1599 = vst [vmem:[#allocation10 + $0x20] sm:$0xff] %v1583
    %1600 = vst [vmem:[#allocation10 + $0x28] sm:$0xff] %v1584
    %1601 = vst [vmem:[#allocation10 + $0x30] sm:$0xff] %v1585
    %1602 = vst [vmem:[#allocation10 + $0x38] sm:$0xff] %v1586
    %1603 = vst [vmem:[#allocation10 + $0x40] sm:$0xff] %v1587
    %1604 = vst [vmem:[#allocation10 + $0x48] sm:$0xff] %v1588
    %1605 = vst [vmem:[#allocation10 + $0x50] sm:$0xff] %v1589
    %1606 = vst [vmem:[#allocation10 + $0x58] sm:$0xff] %v1590
    %1607 = vst [vmem:[#allocation10 + $0x60] sm:$0xff] %v1591
    %1608 = vst [vmem:[#allocation10 + $0x68] sm:$0xff] %v1592
    %1609 = vst [vmem:[#allocation10 + $0x70] sm:$0xff] %v1593
    %1610 = vst [vmem:[#allocation10 + $0x78] sm:$0xff] %v1594
    // Predicated region
    $region50: #{tpu_custom_call.1} parent=1 // pred_check
      _
    $region51: #{tpu_custom_call.1} parent=1 // pred_check_branch
      %1612 = sbr.rel (0) target = $region53
    $region52: #{tpu_custom_call.1} parent=1 // pred_region
      %s1614 = ssub.s32 2048, 2048
      %1615 = vsyncadd [#allocation7], %s1614
      %s1616 = sshll.u32 [#allocation10], 4
      %s1617 = int_to_ptr.vmem [resolvable:$true] %s1616
      %1622 = dma.vmem_to_hbm [thread:$0]  %s1617, 2048, %s10, [#allocation7], 128, 128, 8
    $region53: #{tpu_custom_call.1} parent=1 // pred_fallthru
      _
    // Predicated region
    $region54: #{tpu_custom_call.1} parent=1 // pred_check
      _
    $region55: #{tpu_custom_call.1} parent=1 // pred_check_branch
      %1624 = sbr.rel (0) target = $region57
    $region56: #{tpu_custom_call.1} parent=1 // pred_region
      %1625 = dma.done [#allocation7], 2048
    $region57: #{tpu_custom_call.1} parent=1 // pred_fallthru
      _
    %1626 = vsyncpa [#allocation6], 1
    %1627 = vsyncpa [#allocation9], 1
    %1628 = vsyncpa [#allocation7], 1

</llo_original>
